<compile_context>
chip_gen: v6e
topology: v6e:2x2x1
jax: 0.10.0
libtpu: 0.0.40
codegen_flags: <defaults>
</compile_context>

<pallas_src>
import functools

import jax
import jax.numpy as jnp
from jax import lax
from jax.experimental import pallas as pl
from jax.experimental.pallas import tpu as pltpu


def _sae_kernel(states_ref, relations_ref, mask_ref,
                ws1_ref, bs1_ref, ws2_ref, bs2_ref,
                wr1r_ref, br1_ref, ws0f_ref, wr2_ref, br2_ref,
                wgam_ref, bg_ref,
                wa1r_ref, ba1_ref, ws1f_ref, wa2_ref, ba2_ref,
                state_out_ref, action_out_ref,
                *, bt, a, h):
    """One grid step = `bt` batch elements, fully fused forward pass."""
    baa = bt * a * a                    # rows indexed by (b, i, j)
    cd = ws1_ref.dtype                  # MXU operand dtype (bf16); accumulation is f32
    relu = lambda x: jnp.maximum(x, 0.0)

    def mm(x_cd, w_ref):
        # Operands already in the weight dtype; f32 MXU accumulation.
        return jnp.dot(x_cd, w_ref[...], preferred_element_type=jnp.float32)

    # ---- state encoder: Linear -> ReLU -> Linear -> ReLU --------------------
    s = states_ref[...].astype(cd)                                   # (bt*a, S)
    h0 = relu(mm(s, ws1_ref) + bs1_ref[...]).astype(cd)
    state0 = relu(mm(h0, ws2_ref) + bs2_ref[...])                    # (bt*a, h) f32

    # ---- shared-LHS fusion: state0 @ [wr1s | wgs] (one (h, 2h) matmul) ------
    s0f = mm(state0.astype(cd), ws0f_ref)                            # (bt*a, 2h)
    t_st = s0f[:, :h]      # relation-encoder per-(b, j) term
    g_st = s0f[:, h:]      # aggregator 'state' slice of wg

    # ---- relation encoder on cat([relation[b,i,j], state0[b,j]], -1) --------
    # split matmul: rel @ wr1[:R] + state0 @ wr1[R:] (no concat, no reshuffle)
    t_rel = mm(relations_ref[...].astype(cd), wr1r_ref) + br1_ref[...]   # (baa, h)
    pre1 = (t_rel.reshape(bt, a, a, h)
            + jnp.broadcast_to(t_st.reshape(bt, 1, a, h), (bt, a, a, h)))
    rh = relu(pre1).reshape(baa, h).astype(cd)
    relation = relu(mm(rh, wr2_ref) + br2_ref[...])                  # (baa, 2h) f32

    # ---- relation aggregator: single-matmul form ----------------------------
    rel3 = relation.reshape(bt * a, a, 2 * h)                        # rows (b,i), j, 2h
    masked = rel3 * mask_ref[...]                                    # mask (bt*a, a, 1), j-indexed
    red_sum = jnp.sum(masked, axis=1)                                # (bt*a, 2h)
    red_max = jnp.max(masked, axis=1)                                # safe: relation >= 0 post-ReLU
    lane = lax.broadcasted_iota(jnp.int32, (bt * a, 2 * h), 1)
    # [mean-lanes | max-lanes]; torch .mean divides by the full agent count `a`.
    agg = jnp.where(lane < h, red_sum * (1.0 / a), red_max)
    state1 = relu(mm(agg.astype(cd), wgam_ref) + g_st + bg_ref[...])   # (bt*a, h) f32

    # ---- action encoder on cat([relation, state1[b,j], state1[b,i]], -1) ----
    u = mm(relation.astype(cd), wa1r_ref) + ba1_ref[...]             # (baa, h)
    s1f = mm(state1.astype(cd), ws1f_ref)                            # (bt*a, 2h): [:h]=j-term, [h:]=i-term
    pre2 = (u.reshape(bt, a, a, h)
            + jnp.broadcast_to(s1f[:, :h].reshape(bt, 1, a, h), (bt, a, a, h))
            + jnp.broadcast_to(s1f[:, h:].reshape(bt, a, 1, h), (bt, a, a, h)))
    ah = relu(pre2).reshape(baa, h).astype(cd)
    action = relu(mm(ah, wa2_ref) + ba2_ref[...])                    # (baa, 2h)

    state_out_ref[...] = state1.astype(state_out_ref.dtype)
    action_out_ref[...] = action.astype(action_out_ref.dtype)


def _vmem_budgets():
    """(tile_budget_bytes, vmem_limit_bytes), sized to the local TPU generation."""
    try:
        phys = int(pltpu.get_tpu_info().vmem_capacity_bytes)
    except Exception:
        phys = 64 << 20                      # conservative fallback: v7x per-TC VMEM
    tile_budget = phys // 2                  # leave room for double buffers / compiler scratch
    vmem_limit = min(phys - (8 << 20), tile_budget + tile_budget // 2)
    return tile_budget, max(vmem_limit, 16 << 20)


def _choose_batch_tile(B, A, S, R, H, vmem_budget_bytes):
    """Largest useful batch tile under the VMEM budget.

    Whenever B > 1 the grid is kept at length >= 2 so both v7x TensorCores get work
    via the 'parallel' grid axis (the big matmuls are K/N-limited, not M-limited).
    Among admissible tiles, prefer the smallest one whose per-step (b,i,j) row count
    already amortizes the ~0.35 us grid-step overhead.
    """
    f32 = 4
    per_b = f32 * (
        2 * (A * S + A * A * R + A * A)          # double-buffered inputs (+mask)
        + 2 * (A * H + A * A * 2 * H)            # double-buffered outputs
        + 12 * A * A * H                         # fused intermediates + cast copies (rough)
    )
    candidates = [bt for bt in range(1, B + 1)
                  if B % bt == 0 and ((bt * A) % 8 == 0 or bt == B)]
    fitting = [bt for bt in candidates if bt * per_b <= vmem_budget_bytes] or candidates[:1]
    pool = fitting
    if B > 1:
        multi = [bt for bt in fitting if bt < B]   # grid >= 2 -> v7x 2-TC sharding
        if multi:
            pool = multi
    rows_target = 1024                             # per-step (b,i,j) matmul rows
    big = [bt for bt in pool if bt * A * A >= rows_target]
    return min(big) if big else max(pool)


def state_action_encoder(states, relations, alive_mask, params, *,
                         compute_dtype=jnp.bfloat16,
                         state_dtype=jnp.float32,
                         action_dtype=jnp.bfloat16,
                         batch_tile=None):
    B, A, S = states.shape
    R = relations.shape[-1]
    H = params['ws1'].shape[1]

    tile_budget, vmem_limit = _vmem_budgets()
    Bt = batch_tile if batch_tile is not None else _choose_batch_tile(B, A, S, R, H, tile_budget)
    assert B % Bt == 0, (B, Bt)
    grid = (B // Bt,)

    f32 = jnp.float32
    # Flat row-major 2-D views of the inputs (free metadata reshapes outside the kernel).
    s2 = states.astype(f32).reshape(B * A, S)
    r2 = relations.astype(f32).reshape(B * A * A, R)
    # Mask row for output row (b, i) is alive_mask[b, :] (aggregation is over the j axis).
    mask3 = jnp.broadcast_to(alive_mask.astype(f32)[:, None, :, None],
                             (B, A, A, 1)).reshape(B * A, A, 1)

    # Host-side weight slicing / N-wise fusion -> concat-free matmuls inside the kernel.
    p = params
    cast_w = lambda x: x.astype(compute_dtype)
    cast_b = lambda x: x.astype(f32)
    param_list = [
        cast_w(p['ws1']), cast_b(p['bs1']),
        cast_w(p['ws2']), cast_b(p['bs2']),
        cast_w(p['wr1'][:R]), cast_b(p['br1']),
        cast_w(jnp.concatenate([p['wr1'][R:], p['wg'][:H]], axis=1)),      # state0 @ [wr1s|wgs]
        cast_w(p['wr2']), cast_b(p['br2']),
        cast_w(p['wg'][H:]), cast_b(p['bg']),                              # [mean|max] @ [wga;wgm]
        cast_w(p['wa1'][:2 * H]), cast_b(p['ba1']),
        cast_w(jnp.concatenate([p['wa1'][2 * H:3 * H], p['wa1'][3 * H:]], axis=1)),  # state1 @ [wa1j|wa1i]
        cast_w(p['wa2']), cast_b(p['ba2']),
    ]

    def resident(shape):
        n = len(shape)
        return pl.BlockSpec(shape, lambda g, _n=n: (0,) * _n)   # constant -> stays in VMEM

    in_specs = [
        pl.BlockSpec((Bt * A, S), lambda g: (g, 0)),
        pl.BlockSpec((Bt * A * A, R), lambda g: (g, 0)),
        pl.BlockSpec((Bt * A, A, 1), lambda g: (g, 0, 0)),
    ] + [resident(w.shape) for w in param_list]

    out_shapes = (
        jax.ShapeDtypeStruct((B * A, H), state_dtype),
        jax.ShapeDtypeStruct((B * A * A, 2 * H), action_dtype),
    )
    out_specs = (
        pl.BlockSpec((Bt * A, H), lambda g: (g, 0)),
        pl.BlockSpec((Bt * A * A, 2 * H), lambda g: (g, 0)),
    )

    kernel = functools.partial(_sae_kernel, bt=Bt, a=A, h=H)

    state_flat, action_flat = pl.pallas_call(
        kernel,
        out_shape=out_shapes,
        grid_spec=pltpu.PrefetchScalarGridSpec(
            num_scalar_prefetch=0,
            grid=grid,
            in_specs=in_specs,
            out_specs=out_specs,
        ),
        compiler_params=pltpu.CompilerParams(
            dimension_semantics=("parallel",),
            vmem_limit_bytes=int(vmem_limit),
        ),
    )(s2, r2, mask3, *param_list)

    # TODO(synk): the reference's final `torch.cat([state, action_embed], dim=1)` mixes a
    # 3-D (B, A, H) and a 4-D (B, A, A, 2H) tensor and would raise in PyTorch for any
    # consistent input shapes; we return both tensors instead of faking a concat.
    return state_flat.reshape(B, A, H), action_flat.reshape(B, A, A, 2 * H)


def init_params(key, state_len, relation_len, hidden_len):
    H = hidden_len
    shapes = {
        'ws1': (state_len, H), 'bs1': (1, H),
        'ws2': (H, H), 'bs2': (1, H),
        'wr1': (relation_len + H, H), 'br1': (1, H),
        'wr2': (H, 2 * H), 'br2': (1, 2 * H),
        'wg': (3 * H, H), 'bg': (1, H),
        'wa1': (4 * H, H), 'ba1': (1, H),
        'wa2': (H, 2 * H), 'ba2': (1, 2 * H),
    }
    params = {}
    names = sorted(shapes)
    keys = jax.random.split(key, len(names))
    for k, name in zip(keys, names):
        shp = shapes[name]
        fan_in = shapes['w' + name[1:]][0]   # scale by fan-in of the matching weight
        params[name] = (jax.random.normal(k, shp, jnp.float32) / jnp.sqrt(fan_in)).astype(jnp.float32)
    return params


def reference(states, relations, alive_mask, params, compute_dtype=jnp.float32):
    """Pure-JAX reference of the same forward pass (concat formulation)."""
    relu = lambda x: jnp.maximum(x, 0.0)
    cd = compute_dtype

    def lin(x, w, b):
        y = jnp.einsum('...k,kn->...n', x.astype(cd), w.astype(cd),
                       preferred_element_type=jnp.float32)
        return y + b[0]

    B, A, _ = states.shape
    st = relu(lin(relu(lin(states, params['ws1'], params['bs1'])),
                  params['ws2'], params['bs2']))
    H = st.shape[-1]
    rel_in = jnp.concatenate(
        [relations, jnp.broadcast_to(st[:, None, :, :], (B, A, A, H))], axis=-1)
    rel = relu(lin(relu(lin(rel_in, params['wr1'], params['br1'])),
                   params['wr2'], params['br2']))
    m = alive_mask[:, None, :, None]
    ravr = (rel[..., :H] * m).mean(-2)
    rmax = (rel[..., H:] * m).max(-2)
    st2 = relu(lin(jnp.concatenate([st, ravr, rmax], -1), params['wg'], params['bg']))
    act_in = jnp.concatenate(
        [rel,
         jnp.broadcast_to(st2[:, None, :, :], (B, A, A, H)),
         jnp.broadcast_to(st2[:, :, None, :], (B, A, A, H))], axis=-1)
    ae = relu(lin(relu(lin(act_in, params['wa1'], params['ba1'])),
                  params['wa2'], params['ba2']))
    return st2, ae


if __name__ == "__main__":
    # small shapes: batch=2, agents=8, state_len=16, relation_len=12, hidden_len=32
    B, A, S, R, H = 2, 8, 16, 12, 32
    key = jax.random.PRNGKey(0)
    k_s, k_r, k_m, k_p = jax.random.split(key, 4)
    states = jax.random.normal(k_s, (B, A, S), jnp.float32)
    relations = jax.random.normal(k_r, (B, A, A, R), jnp.float32)
    alive_mask = (jax.random.uniform(k_m, (B, A)) < 0.75).astype(jnp.float32)
    params = init_params(k_p, S, R, H)

    state_out, action_out = state_action_encoder(states, relations, alive_mask, params)
    state_out = jax.block_until_ready(state_out)
    action_out = jax.block_until_ready(action_out)

    assert state_out.shape == (B, A, H)
    assert action_out.shape == (B, A, A, 2 * H)

    state_f = state_out.astype(jnp.float32)
    action_f = action_out.astype(jnp.float32)

    # Primary check: pure-JAX reference with the same precision policy
    # (bf16 MXU operands, f32 accumulation; action output rounded to bf16).
    ref_state_bf, ref_action_bf = reference(states, relations, alive_mask, params,
                                            compute_dtype=jnp.bfloat16)
    assert jnp.allclose(state_f, ref_state_bf, atol=1e-2, rtol=1e-2), \
        float(jnp.max(jnp.abs(state_f - ref_state_bf)))
    assert jnp.allclose(action_f, ref_action_bf, atol=2e-2, rtol=2e-2), \
        float(jnp.max(jnp.abs(action_f - ref_action_bf)))

    # Sanity check against the full-f32 reference (differences are bf16 rounding only).
    ref_state, ref_action = reference(states, relations, alive_mask, params)
    assert jnp.allclose(state_f, ref_state, atol=0.1, rtol=0.1)
    assert jnp.allclose(action_f, ref_action, atol=0.1, rtol=0.1)

    print("KERNEL_OK")
</pallas_src>

<mosaic_0001>
module attributes {stable_mosaic.version = 11 : i64} {
  func.func @_sae_kernel(%arg0: i32, %arg1: memref<8x16xf32, #tpu.memory_space<vmem>>, %arg2: memref<64x12xf32, #tpu.memory_space<vmem>>, %arg3: memref<8x8x1xf32, #tpu.memory_space<vmem>>, %arg4: memref<16x32xbf16, #tpu.memory_space<vmem>>, %arg5: memref<1x32xf32, #tpu.memory_space<vmem>>, %arg6: memref<32x32xbf16, #tpu.memory_space<vmem>>, %arg7: memref<1x32xf32, #tpu.memory_space<vmem>>, %arg8: memref<12x32xbf16, #tpu.memory_space<vmem>>, %arg9: memref<1x32xf32, #tpu.memory_space<vmem>>, %arg10: memref<32x64xbf16, #tpu.memory_space<vmem>>, %arg11: memref<32x64xbf16, #tpu.memory_space<vmem>>, %arg12: memref<1x64xf32, #tpu.memory_space<vmem>>, %arg13: memref<64x32xbf16, #tpu.memory_space<vmem>>, %arg14: memref<1x32xf32, #tpu.memory_space<vmem>>, %arg15: memref<64x32xbf16, #tpu.memory_space<vmem>>, %arg16: memref<1x32xf32, #tpu.memory_space<vmem>>, %arg17: memref<32x64xbf16, #tpu.memory_space<vmem>>, %arg18: memref<32x64xbf16, #tpu.memory_space<vmem>>, %arg19: memref<1x64xf32, #tpu.memory_space<vmem>>, %arg20: memref<8x32xf32, #tpu.memory_space<vmem>>, %arg21: memref<64x64xbf16, #tpu.memory_space<vmem>>) attributes {dimension_semantics = [#tpu.dimension_semantics<parallel>], iteration_bounds = array<i64: 2>, scalar_prefetch = 0 : i64, scratch_operands = 0 : i64, tpu.core_type = #tpu.core_type<tc>, window_params = [{transform_indices = @transform_0, window_bounds = array<i64: 8, 16>}, {transform_indices = @transform_1, window_bounds = array<i64: 64, 12>}, {transform_indices = @transform_2, window_bounds = array<i64: 8, 8, 1>}, {pipeline_mode = #tpu.pipeline_mode<synchronous>, transform_indices = @transform_3, window_bounds = array<i64: 16, 32>}, {pipeline_mode = #tpu.pipeline_mode<synchronous>, transform_indices = @transform_4, window_bounds = array<i64: 1, 32>}, {pipeline_mode = #tpu.pipeline_mode<synchronous>, transform_indices = @transform_5, window_bounds = array<i64: 32, 32>}, {pipeline_mode = #tpu.pipeline_mode<synchronous>, transform_indices = @transform_6, window_bounds = array<i64: 1, 32>}, {pipeline_mode = #tpu.pipeline_mode<synchronous>, transform_indices = @transform_7, window_bounds = array<i64: 12, 32>}, {pipeline_mode = #tpu.pipeline_mode<synchronous>, transform_indices = @transform_8, window_bounds = array<i64: 1, 32>}, {pipeline_mode = #tpu.pipeline_mode<synchronous>, transform_indices = @transform_9, window_bounds = array<i64: 32, 64>}, {pipeline_mode = #tpu.pipeline_mode<synchronous>, transform_indices = @transform_10, window_bounds = array<i64: 32, 64>}, {pipeline_mode = #tpu.pipeline_mode<synchronous>, transform_indices = @transform_11, window_bounds = array<i64: 1, 64>}, {pipeline_mode = #tpu.pipeline_mode<synchronous>, transform_indices = @transform_12, window_bounds = array<i64: 64, 32>}, {pipeline_mode = #tpu.pipeline_mode<synchronous>, transform_indices = @transform_13, window_bounds = array<i64: 1, 32>}, {pipeline_mode = #tpu.pipeline_mode<synchronous>, transform_indices = @transform_14, window_bounds = array<i64: 64, 32>}, {pipeline_mode = #tpu.pipeline_mode<synchronous>, transform_indices = @transform_15, window_bounds = array<i64: 1, 32>}, {pipeline_mode = #tpu.pipeline_mode<synchronous>, transform_indices = @transform_16, window_bounds = array<i64: 32, 64>}, {pipeline_mode = #tpu.pipeline_mode<synchronous>, transform_indices = @transform_17, window_bounds = array<i64: 32, 64>}, {pipeline_mode = #tpu.pipeline_mode<synchronous>, transform_indices = @transform_18, window_bounds = array<i64: 1, 64>}, {transform_indices = @transform_19, window_bounds = array<i64: 8, 32>}, {transform_indices = @transform_20, window_bounds = array<i64: 64, 64>}]} {
    %c0 = arith.constant 0 : index
    %c0_0 = arith.constant 0 : index
    %0 = vector.load %arg1[%c0, %c0_0] : memref<8x16xf32, #tpu.memory_space<vmem>>, vector<8x16xf32>
    %1 = arith.truncf %0 : vector<8x16xf32> to vector<8x16xbf16>
    %c0_1 = arith.constant 0 : index
    %c0_2 = arith.constant 0 : index
    %2 = vector.load %arg4[%c0_1, %c0_2] : memref<16x32xbf16, #tpu.memory_space<vmem>>, vector<16x32xbf16>
    %cst = arith.constant dense<0.000000e+00> : vector<8x32xf32>
    %3 = tpu.matmul %1, %2, %cst {dimension_numbers = #tpu.dot_dimension_numbers<[1], [0], [0], [1], [0, 0, 1, 1], [], []>} : vector<8x16xbf16>, vector<16x32xbf16>, vector<8x32xf32> -> vector<8x32xf32>
    %c0_3 = arith.constant 0 : index
    %c0_4 = arith.constant 0 : index
    %4 = vector.load %arg5[%c0_3, %c0_4] : memref<1x32xf32, #tpu.memory_space<vmem>>, vector<1x32xf32>
    %5 = vector.broadcast %4 : vector<1x32xf32> to vector<8x32xf32>
    %6 = arith.addf %3, %5 : vector<8x32xf32>
    %cst_5 = arith.constant 0.000000e+00 : f32
    %7 = vector.broadcast %cst_5 : f32 to vector<8x32xf32>
    %8 = arith.maximumf %6, %7 : vector<8x32xf32>
    %9 = arith.truncf %8 : vector<8x32xf32> to vector<8x32xbf16>
    %c0_6 = arith.constant 0 : index
    %c0_7 = arith.constant 0 : index
    %10 = vector.load %arg6[%c0_6, %c0_7] : memref<32x32xbf16, #tpu.memory_space<vmem>>, vector<32x32xbf16>
    %cst_8 = arith.constant dense<0.000000e+00> : vector<8x32xf32>
    %11 = tpu.matmul %9, %10, %cst_8 {dimension_numbers = #tpu.dot_dimension_numbers<[1], [0], [0], [1], [0, 0, 1, 1], [], []>} : vector<8x32xbf16>, vector<32x32xbf16>, vector<8x32xf32> -> vector<8x32xf32>
    %c0_9 = arith.constant 0 : index
    %c0_10 = arith.constant 0 : index
    %12 = vector.load %arg7[%c0_9, %c0_10] : memref<1x32xf32, #tpu.memory_space<vmem>>, vector<1x32xf32>
    %13 = vector.broadcast %12 : vector<1x32xf32> to vector<8x32xf32>
    %14 = arith.addf %11, %13 : vector<8x32xf32>
    %cst_11 = arith.constant 0.000000e+00 : f32
    %15 = vector.broadcast %cst_11 : f32 to vector<8x32xf32>
    %16 = arith.maximumf %14, %15 : vector<8x32xf32>
    %17 = arith.truncf %16 : vector<8x32xf32> to vector<8x32xbf16>
    %c0_12 = arith.constant 0 : index
    %c0_13 = arith.constant 0 : index
    %18 = vector.load %arg10[%c0_12, %c0_13] : memref<32x64xbf16, #tpu.memory_space<vmem>>, vector<32x64xbf16>
    %cst_14 = arith.constant dense<0.000000e+00> : vector<8x64xf32>
    %19 = tpu.matmul %17, %18, %cst_14 {dimension_numbers = #tpu.dot_dimension_numbers<[1], [0], [0], [1], [0, 0, 1, 1], [], []>} : vector<8x32xbf16>, vector<32x64xbf16>, vector<8x64xf32> -> vector<8x64xf32>
    %20 = vector.extract_strided_slice %19 {offsets = [0, 0], sizes = [8, 32], strides = [1, 1]} : vector<8x64xf32> to vector<8x32xf32>
    %21 = vector.extract_strided_slice %19 {offsets = [0, 32], sizes = [8, 32], strides = [1, 1]} : vector<8x64xf32> to vector<8x32xf32>
    %c0_15 = arith.constant 0 : index
    %c0_16 = arith.constant 0 : index
    %22 = vector.load %arg2[%c0_15, %c0_16] : memref<64x12xf32, #tpu.memory_space<vmem>>, vector<64x12xf32>
    %23 = arith.truncf %22 : vector<64x12xf32> to vector<64x12xbf16>
    %c0_17 = arith.constant 0 : index
    %c0_18 = arith.constant 0 : index
    %24 = vector.load %arg8[%c0_17, %c0_18] : memref<12x32xbf16, #tpu.memory_space<vmem>>, vector<12x32xbf16>
    %cst_19 = arith.constant dense<0.000000e+00> : vector<64x32xf32>
    %25 = tpu.matmul %23, %24, %cst_19 {dimension_numbers = #tpu.dot_dimension_numbers<[1], [0], [0], [1], [0, 0, 1, 1], [], []>} : vector<64x12xbf16>, vector<12x32xbf16>, vector<64x32xf32> -> vector<64x32xf32>
    %c0_20 = arith.constant 0 : index
    %c0_21 = arith.constant 0 : index
    %26 = vector.load %arg9[%c0_20, %c0_21] : memref<1x32xf32, #tpu.memory_space<vmem>>, vector<1x32xf32>
    %27 = vector.broadcast %26 : vector<1x32xf32> to vector<64x32xf32>
    %28 = arith.addf %25, %27 : vector<64x32xf32>
    %29 = vector.shape_cast %28 : vector<64x32xf32> to vector<1x8x8x32xf32>
    %30 = vector.shape_cast %20 : vector<8x32xf32> to vector<1x1x8x32xf32>
    %31 = vector.shape_cast %30 : vector<1x1x8x32xf32> to vector<1x1x8x32xf32>
    %32 = vector.broadcast %31 : vector<1x1x8x32xf32> to vector<1x8x8x32xf32>
    %33 = arith.addf %29, %32 : vector<1x8x8x32xf32>
    %cst_22 = arith.constant 0.000000e+00 : f32
    %34 = vector.broadcast %cst_22 : f32 to vector<1x8x8x32xf32>
    %35 = arith.maximumf %33, %34 : vector<1x8x8x32xf32>
    %36 = vector.shape_cast %35 : vector<1x8x8x32xf32> to vector<64x32xf32>
    %37 = arith.truncf %36 : vector<64x32xf32> to vector<64x32xbf16>
    %c0_23 = arith.constant 0 : index
    %c0_24 = arith.constant 0 : index
    %38 = vector.load %arg11[%c0_23, %c0_24] : memref<32x64xbf16, #tpu.memory_space<vmem>>, vector<32x64xbf16>
    %cst_25 = arith.constant dense<0.000000e+00> : vector<64x64xf32>
    %39 = tpu.matmul %37, %38, %cst_25 {dimension_numbers = #tpu.dot_dimension_numbers<[1], [0], [0], [1], [0, 0, 1, 1], [], []>} : vector<64x32xbf16>, vector<32x64xbf16>, vector<64x64xf32> -> vector<64x64xf32>
    %c0_26 = arith.constant 0 : index
    %c0_27 = arith.constant 0 : index
    %40 = vector.load %arg12[%c0_26, %c0_27] : memref<1x64xf32, #tpu.memory_space<vmem>>, vector<1x64xf32>
    %41 = vector.broadcast %40 : vector<1x64xf32> to vector<64x64xf32>
    %42 = arith.addf %39, %41 : vector<64x64xf32>
    %cst_28 = arith.constant 0.000000e+00 : f32
    %43 = vector.broadcast %cst_28 : f32 to vector<64x64xf32>
    %44 = arith.maximumf %42, %43 : vector<64x64xf32>
    %45 = vector.shape_cast %44 : vector<64x64xf32> to vector<8x8x64xf32>
    %c0_29 = arith.constant 0 : index
    %c0_30 = arith.constant 0 : index
    %c0_31 = arith.constant 0 : index
    %46 = vector.load %arg3[%c0_29, %c0_30, %c0_31] : memref<8x8x1xf32, #tpu.memory_space<vmem>>, vector<8x8x1xf32>
    %47 = vector.broadcast %46 : vector<8x8x1xf32> to vector<8x8x64xf32>
    %48 = arith.mulf %45, %47 : vector<8x8x64xf32>
    %cst_32 = arith.constant dense<0.000000e+00> : vector<8x64xf32>
    %49 = vector.multi_reduction <add>, %48, %cst_32 [1] : vector<8x8x64xf32> to vector<8x64xf32>
    %cst_33 = arith.constant dense<0xFF800000> : vector<8x64xf32>
    %50 = vector.multi_reduction <maximumf>, %48, %cst_33 [1] : vector<8x8x64xf32> to vector<8x64xf32>
    %51 = tpu.iota {dimensions = array<i32: 1>} : vector<8x64xi32>
    %c32_i32 = arith.constant 32 : i32
    %52 = vector.broadcast %c32_i32 : i32 to vector<8x64xi32>
    %53 = arith.cmpi slt, %51, %52 : vector<8x64xi32>
    %cst_34 = arith.constant 1.250000e-01 : f32
    %54 = vector.broadcast %cst_34 : f32 to vector<8x64xf32>
    %55 = arith.mulf %49, %54 : vector<8x64xf32>
    %56 = arith.select %53, %55, %50 : vector<8x64xi1>, vector<8x64xf32>
    %57 = arith.truncf %56 : vector<8x64xf32> to vector<8x64xbf16>
    %c0_35 = arith.constant 0 : index
    %c0_36 = arith.constant 0 : index
    %58 = vector.load %arg13[%c0_35, %c0_36] : memref<64x32xbf16, #tpu.memory_space<vmem>>, vector<64x32xbf16>
    %cst_37 = arith.constant dense<0.000000e+00> : vector<8x32xf32>
    %59 = tpu.matmul %57, %58, %cst_37 {dimension_numbers = #tpu.dot_dimension_numbers<[1], [0], [0], [1], [0, 0, 1, 1], [], []>} : vector<8x64xbf16>, vector<64x32xbf16>, vector<8x32xf32> -> vector<8x32xf32>
    %60 = arith.addf %59, %21 : vector<8x32xf32>
    %c0_38 = arith.constant 0 : index
    %c0_39 = arith.constant 0 : index
    %61 = vector.load %arg14[%c0_38, %c0_39] : memref<1x32xf32, #tpu.memory_space<vmem>>, vector<1x32xf32>
    %62 = vector.broadcast %61 : vector<1x32xf32> to vector<8x32xf32>
    %63 = arith.addf %60, %62 : vector<8x32xf32>
    %cst_40 = arith.constant 0.000000e+00 : f32
    %64 = vector.broadcast %cst_40 : f32 to vector<8x32xf32>
    %65 = arith.maximumf %63, %64 : vector<8x32xf32>
    %66 = arith.truncf %44 : vector<64x64xf32> to vector<64x64xbf16>
    %c0_41 = arith.constant 0 : index
    %c0_42 = arith.constant 0 : index
    %67 = vector.load %arg15[%c0_41, %c0_42] : memref<64x32xbf16, #tpu.memory_space<vmem>>, vector<64x32xbf16>
    %cst_43 = arith.constant dense<0.000000e+00> : vector<64x32xf32>
    %68 = tpu.matmul %66, %67, %cst_43 {dimension_numbers = #tpu.dot_dimension_numbers<[1], [0], [0], [1], [0, 0, 1, 1], [], []>} : vector<64x64xbf16>, vector<64x32xbf16>, vector<64x32xf32> -> vector<64x32xf32>
    %c0_44 = arith.constant 0 : index
    %c0_45 = arith.constant 0 : index
    %69 = vector.load %arg16[%c0_44, %c0_45] : memref<1x32xf32, #tpu.memory_space<vmem>>, vector<1x32xf32>
    %70 = vector.broadcast %69 : vector<1x32xf32> to vector<64x32xf32>
    %71 = arith.addf %68, %70 : vector<64x32xf32>
    %72 = arith.truncf %65 : vector<8x32xf32> to vector<8x32xbf16>
    %c0_46 = arith.constant 0 : index
    %c0_47 = arith.constant 0 : index
    %73 = vector.load %arg17[%c0_46, %c0_47] : memref<32x64xbf16, #tpu.memory_space<vmem>>, vector<32x64xbf16>
    %cst_48 = arith.constant dense<0.000000e+00> : vector<8x64xf32>
    %74 = tpu.matmul %72, %73, %cst_48 {dimension_numbers = #tpu.dot_dimension_numbers<[1], [0], [0], [1], [0, 0, 1, 1], [], []>} : vector<8x32xbf16>, vector<32x64xbf16>, vector<8x64xf32> -> vector<8x64xf32>
    %75 = vector.shape_cast %71 : vector<64x32xf32> to vector<1x8x8x32xf32>
    %76 = vector.extract_strided_slice %74 {offsets = [0, 0], sizes = [8, 32], strides = [1, 1]} : vector<8x64xf32> to vector<8x32xf32>
    %77 = vector.shape_cast %76 : vector<8x32xf32> to vector<1x1x8x32xf32>
    %78 = vector.shape_cast %77 : vector<1x1x8x32xf32> to vector<1x1x8x32xf32>
    %79 = vector.broadcast %78 : vector<1x1x8x32xf32> to vector<1x8x8x32xf32>
    %80 = arith.addf %75, %79 : vector<1x8x8x32xf32>
    %81 = vector.extract_strided_slice %74 {offsets = [0, 32], sizes = [8, 32], strides = [1, 1]} : vector<8x64xf32> to vector<8x32xf32>
    %82 = vector.shape_cast %81 : vector<8x32xf32> to vector<1x8x1x32xf32>
    %83 = vector.shape_cast %82 : vector<1x8x1x32xf32> to vector<1x8x1x32xf32>
    %84 = vector.broadcast %83 : vector<1x8x1x32xf32> to vector<1x8x8x32xf32>
    %85 = arith.addf %80, %84 : vector<1x8x8x32xf32>
    %cst_49 = arith.constant 0.000000e+00 : f32
    %86 = vector.broadcast %cst_49 : f32 to vector<1x8x8x32xf32>
    %87 = arith.maximumf %85, %86 : vector<1x8x8x32xf32>
    %88 = vector.shape_cast %87 : vector<1x8x8x32xf32> to vector<64x32xf32>
    %89 = arith.truncf %88 : vector<64x32xf32> to vector<64x32xbf16>
    %c0_50 = arith.constant 0 : index
    %c0_51 = arith.constant 0 : index
    %90 = vector.load %arg18[%c0_50, %c0_51] : memref<32x64xbf16, #tpu.memory_space<vmem>>, vector<32x64xbf16>
    %cst_52 = arith.constant dense<0.000000e+00> : vector<64x64xf32>
    %91 = tpu.matmul %89, %90, %cst_52 {dimension_numbers = #tpu.dot_dimension_numbers<[1], [0], [0], [1], [0, 0, 1, 1], [], []>} : vector<64x32xbf16>, vector<32x64xbf16>, vector<64x64xf32> -> vector<64x64xf32>
    %c0_53 = arith.constant 0 : index
    %c0_54 = arith.constant 0 : index
    %92 = vector.load %arg19[%c0_53, %c0_54] : memref<1x64xf32, #tpu.memory_space<vmem>>, vector<1x64xf32>
    %93 = vector.broadcast %92 : vector<1x64xf32> to vector<64x64xf32>
    %94 = arith.addf %91, %93 : vector<64x64xf32>
    %cst_55 = arith.constant 0.000000e+00 : f32
    %95 = vector.broadcast %cst_55 : f32 to vector<64x64xf32>
    %96 = arith.maximumf %94, %95 : vector<64x64xf32>
    %c0_56 = arith.constant 0 : index
    %c0_57 = arith.constant 0 : index
    %97 = vector.load %arg20[%c0_56, %c0_57] : memref<8x32xf32, #tpu.memory_space<vmem>>, vector<8x32xf32>
    tpu.vector_store %arg20[%c0_56, %c0_57], %65 {strides = array<i32>} : memref<8x32xf32, #tpu.memory_space<vmem>>, vector<8x32xf32>,
    %98 = arith.truncf %96 : vector<64x64xf32> to vector<64x64xbf16>
    %c0_58 = arith.constant 0 : index
    %c0_59 = arith.constant 0 : index
    %99 = vector.load %arg21[%c0_58, %c0_59] : memref<64x64xbf16, #tpu.memory_space<vmem>>, vector<64x64xbf16>
    tpu.vector_store %arg21[%c0_58, %c0_59], %98 {strides = array<i32>} : memref<64x64xbf16, #tpu.memory_space<vmem>>, vector<64x64xbf16>,
    return
  }
  func.func @transform_0(%arg0: i32) -> (i32, i32) {
    %c0_i32 = arith.constant 0 : i32
    %c0_i32_0 = arith.constant 0 : i32
    return %arg0, %c0_i32 : i32, i32
  }
  func.func @transform_1(%arg0: i32) -> (i32, i32) {
    %c0_i32 = arith.constant 0 : i32
    %c0_i32_0 = arith.constant 0 : i32
    return %arg0, %c0_i32 : i32, i32
  }
  func.func @transform_2(%arg0: i32) -> (i32, i32, i32) {
    %c0_i32 = arith.constant 0 : i32
    %c0_i32_0 = arith.constant 0 : i32
    %c0_i32_1 = arith.constant 0 : i32
    return %arg0, %c0_i32, %c0_i32_0 : i32, i32, i32
  }
  func.func @transform_3(%arg0: i32) -> (i32, i32) {
    %c0_i32 = arith.constant 0 : i32
    %c0_i32_0 = arith.constant 0 : i32
    %c0_i32_1 = arith.constant 0 : i32
    return %c0_i32, %c0_i32_0 : i32, i32
  }
  func.func @transform_4(%arg0: i32) -> (i32, i32) {
    %c0_i32 = arith.constant 0 : i32
    %c0_i32_0 = arith.constant 0 : i32
    %c0_i32_1 = arith.constant 0 : i32
    return %c0_i32, %c0_i32_0 : i32, i32
  }
  func.func @transform_5(%arg0: i32) -> (i32, i32) {
    %c0_i32 = arith.constant 0 : i32
    %c0_i32_0 = arith.constant 0 : i32
    %c0_i32_1 = arith.constant 0 : i32
    return %c0_i32, %c0_i32_0 : i32, i32
  }
  func.func @transform_6(%arg0: i32) -> (i32, i32) {
    %c0_i32 = arith.constant 0 : i32
    %c0_i32_0 = arith.constant 0 : i32
    %c0_i32_1 = arith.constant 0 : i32
    return %c0_i32, %c0_i32_0 : i32, i32
  }
  func.func @transform_7(%arg0: i32) -> (i32, i32) {
    %c0_i32 = arith.constant 0 : i32
    %c0_i32_0 = arith.constant 0 : i32
    %c0_i32_1 = arith.constant 0 : i32
    return %c0_i32, %c0_i32_0 : i32, i32
  }
  func.func @transform_8(%arg0: i32) -> (i32, i32) {
    %c0_i32 = arith.constant 0 : i32
    %c0_i32_0 = arith.constant 0 : i32
    %c0_i32_1 = arith.constant 0 : i32
    return %c0_i32, %c0_i32_0 : i32, i32
  }
  func.func @transform_9(%arg0: i32) -> (i32, i32) {
    %c0_i32 = arith.constant 0 : i32
    %c0_i32_0 = arith.constant 0 : i32
    %c0_i32_1 = arith.constant 0 : i32
    return %c0_i32, %c0_i32_0 : i32, i32
  }
  func.func @transform_10(%arg0: i32) -> (i32, i32) {
    %c0_i32 = arith.constant 0 : i32
    %c0_i32_0 = arith.constant 0 : i32
    %c0_i32_1 = arith.constant 0 : i32
    return %c0_i32, %c0_i32_0 : i32, i32
  }
  func.func @transform_11(%arg0: i32) -> (i32, i32) {
    %c0_i32 = arith.constant 0 : i32
    %c0_i32_0 = arith.constant 0 : i32
    %c0_i32_1 = arith.constant 0 : i32
    return %c0_i32, %c0_i32_0 : i32, i32
  }
  func.func @transform_12(%arg0: i32) -> (i32, i32) {
    %c0_i32 = arith.constant 0 : i32
    %c0_i32_0 = arith.constant 0 : i32
    %c0_i32_1 = arith.constant 0 : i32
    return %c0_i32, %c0_i32_0 : i32, i32
  }
  func.func @transform_13(%arg0: i32) -> (i32, i32) {
    %c0_i32 = arith.constant 0 : i32
    %c0_i32_0 = arith.constant 0 : i32
    %c0_i32_1 = arith.constant 0 : i32
    return %c0_i32, %c0_i32_0 : i32, i32
  }
  func.func @transform_14(%arg0: i32) -> (i32, i32) {
    %c0_i32 = arith.constant 0 : i32
    %c0_i32_0 = arith.constant 0 : i32
    %c0_i32_1 = arith.constant 0 : i32
    return %c0_i32, %c0_i32_0 : i32, i32
  }
  func.func @transform_15(%arg0: i32) -> (i32, i32) {
    %c0_i32 = arith.constant 0 : i32
    %c0_i32_0 = arith.constant 0 : i32
    %c0_i32_1 = arith.constant 0 : i32
    return %c0_i32, %c0_i32_0 : i32, i32
  }
  func.func @transform_16(%arg0: i32) -> (i32, i32) {
    %c0_i32 = arith.constant 0 : i32
    %c0_i32_0 = arith.constant 0 : i32
    %c0_i32_1 = arith.constant 0 : i32
    return %c0_i32, %c0_i32_0 : i32, i32
  }
  func.func @transform_17(%arg0: i32) -> (i32, i32) {
    %c0_i32 = arith.constant 0 : i32
    %c0_i32_0 = arith.constant 0 : i32
    %c0_i32_1 = arith.constant 0 : i32
    return %c0_i32, %c0_i32_0 : i32, i32
  }
  func.func @transform_18(%arg0: i32) -> (i32, i32) {
    %c0_i32 = arith.constant 0 : i32
    %c0_i32_0 = arith.constant 0 : i32
    %c0_i32_1 = arith.constant 0 : i32
    return %c0_i32, %c0_i32_0 : i32, i32
  }
  func.func @transform_19(%arg0: i32) -> (i32, i32) {
    %c0_i32 = arith.constant 0 : i32
    %c0_i32_0 = arith.constant 0 : i32
    return %arg0, %c0_i32 : i32, i32
  }
  func.func @transform_20(%arg0: i32) -> (i32, i32) {
    %c0_i32 = arith.constant 0 : i32
    %c0_i32_0 = arith.constant 0 : i32
    return %arg0, %c0_i32 : i32, i32
  }
}

</mosaic_0001>

<llo_original>
// kernel: tpu_custom_call.1
$region0: #{tpu_custom_call.1}
  #allocation0 [shape = 'u32[]', space=smem, size = 0x4, offset = 0x4, fixed_abs, tag = 'smem constant byte address 0x4 - core index']
  #allocation1 [shape = 'u32[144,128]{1,0:T(1,128)}', space=vmem, size = 0x12000, scoped, tag = 'internal scratch']
  %s0 = inlined_call_operand.vmem [shape: f32[16,16], index: 0, kind: input, shape index: {}]
  %s1 = inlined_call_operand.vmem [shape: f32[128,12], index: 1, kind: input, shape index: {}]
  %s2 = inlined_call_operand.vmem [shape: f32[16,8,1], index: 2, kind: input, shape index: {}]
  %s3 = inlined_call_operand.vmem [shape: bf16[16,32], index: 3, kind: input, shape index: {}]
  %s4 = inlined_call_operand.vmem [shape: f32[1,32], index: 4, kind: input, shape index: {}]
  %s5 = inlined_call_operand.vmem [shape: bf16[32,32], index: 5, kind: input, shape index: {}]
  %s6 = inlined_call_operand.vmem [shape: f32[1,32], index: 6, kind: input, shape index: {}]
  %s7 = inlined_call_operand.vmem [shape: bf16[12,32], index: 7, kind: input, shape index: {}]
  %s8 = inlined_call_operand.vmem [shape: f32[1,32], index: 8, kind: input, shape index: {}]
  %s9 = inlined_call_operand.vmem [shape: bf16[32,64], index: 9, kind: input, shape index: {}]
  %s10 = inlined_call_operand.vmem [shape: bf16[32,64], index: 10, kind: input, shape index: {}]
  %s11 = inlined_call_operand.vmem [shape: f32[1,64], index: 11, kind: input, shape index: {}]
  %s12 = inlined_call_operand.vmem [shape: bf16[64,32], index: 12, kind: input, shape index: {}]
  %s13 = inlined_call_operand.vmem [shape: f32[1,32], index: 13, kind: input, shape index: {}]
  %s14 = inlined_call_operand.vmem [shape: bf16[64,32], index: 14, kind: input, shape index: {}]
  %s15 = inlined_call_operand.vmem [shape: f32[1,32], index: 15, kind: input, shape index: {}]
  %s16 = inlined_call_operand.vmem [shape: bf16[32,64], index: 16, kind: input, shape index: {}]
  %s17 = inlined_call_operand.vmem [shape: bf16[32,64], index: 17, kind: input, shape index: {}]
  %s18 = inlined_call_operand.vmem [shape: f32[1,64], index: 18, kind: input, shape index: {}]
  %s19 = inlined_call_operand.hbm [shape: f32[16,32], index: 19, kind: output, shape index: {0}]
  %s20 = inlined_call_operand.vmem [shape: bf16[128,64], index: 20, kind: output, shape index: {1}]
  %21 = xla_tuple %s19, %s20
  %s22 = sld [smem:[#allocation0]]
  $region117: #{tpu_custom_call.1} parent=0
    _
  %s24 = ssub.s32 1, %s22
  %s25 = scalar_select 0, %s24, %s22
  $region1: #{tpu_custom_call.1} parent=0
    #allocation2 [shape = 'u8[8192]{0}', space=vmem, size = 0x2000, scoped, tag = 'output window, operand 0']
    #allocation3 [shape = 's32[2]{0}', space=sflag, size = 0x8, scoped, tag = 'scoped memory for tpu_custom_call.1']
    %26 = vsyncpa [#allocation3], 0
    %s27 = scalar_lea.sflag [#allocation3], 1
    %28 = vsyncpa %s27, 0
    loop: start=0, step=1, limit=4
    $region2: #{tpu_custom_call.1} parent=1 // loop_pre_header
      _
    $region3: #{tpu_custom_call.1} parent=1 // loop_header
      %s30 = sphi 0, %s34
      %p31 = scmp.ge.s32.totalorder %s30, 4
      %s40 = sphi 0, %s42
      %s43 = sphi 0, %s40
      %s44 = sphi 0, %s43
      %s60 = sphi 0, %s44
      %s66 = sphi 0, %s68
      %s69 = sphi 0, %s66
      %s70 = sphi 0, %s69
      %s86 = sphi 0, %s70
      %s92 = sphi 0, %s94
      %s95 = sphi 0, %s92
      %s96 = sphi 0, %s95
      %s112 = sphi 0, %s96
      %s116 = sphi 0, %s116
      %s118 = sphi 0, %s116
      %s119 = sphi 0, %s118
      %s133 = sphi 0, %s119
      %s137 = sphi 0, %s137
      %s139 = sphi 0, %s137
      %s140 = sphi 0, %s139
      %s154 = sphi 0, %s140
      %s158 = sphi 0, %s158
      %s160 = sphi 0, %s158
      %s161 = sphi 0, %s160
      %s175 = sphi 0, %s161
      %s179 = sphi 0, %s179
      %s181 = sphi 0, %s179
      %s182 = sphi 0, %s181
      %s196 = sphi 0, %s182
      %s200 = sphi 0, %s200
      %s202 = sphi 0, %s200
      %s203 = sphi 0, %s202
      %s217 = sphi 0, %s203
      %s221 = sphi 0, %s221
      %s223 = sphi 0, %s221
      %s224 = sphi 0, %s223
      %s238 = sphi 0, %s224
      %s242 = sphi 0, %s242
      %s244 = sphi 0, %s242
      %s245 = sphi 0, %s244
      %s259 = sphi 0, %s245
      %s263 = sphi 0, %s263
      %s265 = sphi 0, %s263
      %s266 = sphi 0, %s265
      %s280 = sphi 0, %s266
      %s284 = sphi 0, %s284
      %s286 = sphi 0, %s284
      %s287 = sphi 0, %s286
      %s301 = sphi 0, %s287
      %s305 = sphi 0, %s305
      %s307 = sphi 0, %s305
      %s308 = sphi 0, %s307
      %s322 = sphi 0, %s308
      %s326 = sphi 0, %s326
      %s328 = sphi 0, %s326
      %s329 = sphi 0, %s328
      %s343 = sphi 0, %s329
      %s347 = sphi 0, %s347
      %s349 = sphi 0, %s347
      %s350 = sphi 0, %s349
      %s364 = sphi 0, %s350
      %s368 = sphi 0, %s368
      %s370 = sphi 0, %s368
      %s371 = sphi 0, %s370
      %s385 = sphi 0, %s371
      %s389 = sphi 0, %s389
      %s391 = sphi 0, %s389
      %s392 = sphi 0, %s391
      %s406 = sphi 0, %s392
      %s410 = sphi 0, %s410
      %s412 = sphi 0, %s410
      %s413 = sphi 0, %s412
      %s427 = sphi 0, %s413
      %s431 = sphi 0, %s431
      %s433 = sphi 0, %s431
      %s434 = sphi 0, %s433
      %s448 = sphi 0, %s434
      %s454 = sphi 0, %s456
      %s457 = sphi 0, %s454
      %s458 = sphi 0, %s457
      %s474 = sphi 0, %s458
      %s480 = sphi 0, %s482
      %s483 = sphi 0, %s480
      %s484 = sphi 0, %s483
      %s500 = sphi 0, %s484
    $region4: #{tpu_custom_call.1} parent=1 // loop_header_branch
      %33 = sbr.rel (%p31) target = $region8
    $region5: #{tpu_custom_call.1} parent=1 // loop_body
      %s35 = ssub.s32 %s30, 1
      %s36 = ssub.s32 %s30, 2
      %s37 = sadd.s32 %s30, 1
      %s38 = ssub.s32 %s30, %s37
      %p39 = scmp.eq.s32.totalorder %s38, 0
      %s41 = sadd.s32 %s40, 1
      %s42 = scalar_select %p39, %s40, %s41
      %p45 = pneg %p39
      %p46 = scmp.eq.s32.totalorder %s30, 1
      %p47 = por %p45, %p46
      %p48 = scmp.ne.s32.totalorder %s40, %s43
      %p49 = scmp.eq.s32.totalorder %s30, 0
      %p50 = por %p48, %p49
      %p51 = scmp.ne.s32.totalorder %s40, %s43
      %p52 = scmp.eq.s32.totalorder %s35, 1
      %p53 = por %p51, %p52
      %p54 = scmp.ne.s32.totalorder %s43, %s44
      %p55 = scmp.eq.s32.totalorder %s35, 0
      %p56 = por %p54, %p55
      %p57 = scmp.ne.s32.totalorder %s43, %s44
      %p58 = scmp.eq.s32.totalorder %s36, 1
      %p59 = por %p57, %p58
      %p61 = scmp.ne.s32.totalorder %s44, %s60
      %p62 = scmp.eq.s32.totalorder %s36, 0
      %p63 = por %p61, %p62
      %s64 = ssub.s32 %s30, %s37
      %p65 = scmp.eq.s32.totalorder %s64, 0
      %s67 = sadd.s32 %s66, 1
      %s68 = scalar_select %p65, %s66, %s67
      %p71 = pneg %p65
      %p72 = scmp.eq.s32.totalorder %s30, 1
      %p73 = por %p71, %p72
      %p74 = scmp.ne.s32.totalorder %s66, %s69
      %p75 = scmp.eq.s32.totalorder %s30, 0
      %p76 = por %p74, %p75
      %p77 = scmp.ne.s32.totalorder %s66, %s69
      %p78 = scmp.eq.s32.totalorder %s35, 1
      %p79 = por %p77, %p78
      %p80 = scmp.ne.s32.totalorder %s69, %s70
      %p81 = scmp.eq.s32.totalorder %s35, 0
      %p82 = por %p80, %p81
      %p83 = scmp.ne.s32.totalorder %s69, %s70
      %p84 = scmp.eq.s32.totalorder %s36, 1
      %p85 = por %p83, %p84
      %p87 = scmp.ne.s32.totalorder %s70, %s86
      %p88 = scmp.eq.s32.totalorder %s36, 0
      %p89 = por %p87, %p88
      %s90 = ssub.s32 %s30, %s37
      %p91 = scmp.eq.s32.totalorder %s90, 0
      %s93 = sadd.s32 %s92, 1
      %s94 = scalar_select %p91, %s92, %s93
      %p97 = pneg %p91
      %p98 = scmp.eq.s32.totalorder %s30, 1
      %p99 = por %p97, %p98
      %p100 = scmp.ne.s32.totalorder %s92, %s95
      %p101 = scmp.eq.s32.totalorder %s30, 0
      %p102 = por %p100, %p101
      %p103 = scmp.ne.s32.totalorder %s92, %s95
      %p104 = scmp.eq.s32.totalorder %s35, 1
      %p105 = por %p103, %p104
      %p106 = scmp.ne.s32.totalorder %s95, %s96
      %p107 = scmp.eq.s32.totalorder %s35, 0
      %p108 = por %p106, %p107
      %p109 = scmp.ne.s32.totalorder %s95, %s96
      %p110 = scmp.eq.s32.totalorder %s36, 1
      %p111 = por %p109, %p110
      %p113 = scmp.ne.s32.totalorder %s96, %s112
      %p114 = scmp.eq.s32.totalorder %s36, 0
      %p115 = por %p113, %p114
      %s117 = sadd.s32 %s116, 1
      %p120 = scmp.eq.s32.totalorder %s30, 1
      %p121 = scmp.ne.s32.totalorder %s116, %s118
      %p122 = scmp.eq.s32.totalorder %s30, 0
      %p123 = por %p121, %p122
      %p124 = scmp.ne.s32.totalorder %s116, %s118
      %p125 = scmp.eq.s32.totalorder %s35, 1
      %p126 = por %p124, %p125
      %p127 = scmp.ne.s32.totalorder %s118, %s119
      %p128 = scmp.eq.s32.totalorder %s35, 0
      %p129 = por %p127, %p128
      %p130 = scmp.ne.s32.totalorder %s118, %s119
      %p131 = scmp.eq.s32.totalorder %s36, 1
      %p132 = por %p130, %p131
      %p134 = scmp.ne.s32.totalorder %s119, %s133
      %p135 = scmp.eq.s32.totalorder %s36, 0
      %p136 = por %p134, %p135
      %s138 = sadd.s32 %s137, 1
      %p141 = scmp.eq.s32.totalorder %s30, 1
      %p142 = scmp.ne.s32.totalorder %s137, %s139
      %p143 = scmp.eq.s32.totalorder %s30, 0
      %p144 = por %p142, %p143
      %p145 = scmp.ne.s32.totalorder %s137, %s139
      %p146 = scmp.eq.s32.totalorder %s35, 1
      %p147 = por %p145, %p146
      %p148 = scmp.ne.s32.totalorder %s139, %s140
      %p149 = scmp.eq.s32.totalorder %s35, 0
      %p150 = por %p148, %p149
      %p151 = scmp.ne.s32.totalorder %s139, %s140
      %p152 = scmp.eq.s32.totalorder %s36, 1
      %p153 = por %p151, %p152
      %p155 = scmp.ne.s32.totalorder %s140, %s154
      %p156 = scmp.eq.s32.totalorder %s36, 0
      %p157 = por %p155, %p156
      %s159 = sadd.s32 %s158, 1
      %p162 = scmp.eq.s32.totalorder %s30, 1
      %p163 = scmp.ne.s32.totalorder %s158, %s160
      %p164 = scmp.eq.s32.totalorder %s30, 0
      %p165 = por %p163, %p164
      %p166 = scmp.ne.s32.totalorder %s158, %s160
      %p167 = scmp.eq.s32.totalorder %s35, 1
      %p168 = por %p166, %p167
      %p169 = scmp.ne.s32.totalorder %s160, %s161
      %p170 = scmp.eq.s32.totalorder %s35, 0
      %p171 = por %p169, %p170
      %p172 = scmp.ne.s32.totalorder %s160, %s161
      %p173 = scmp.eq.s32.totalorder %s36, 1
      %p174 = por %p172, %p173
      %p176 = scmp.ne.s32.totalorder %s161, %s175
      %p177 = scmp.eq.s32.totalorder %s36, 0
      %p178 = por %p176, %p177
      %s180 = sadd.s32 %s179, 1
      %p183 = scmp.eq.s32.totalorder %s30, 1
      %p184 = scmp.ne.s32.totalorder %s179, %s181
      %p185 = scmp.eq.s32.totalorder %s30, 0
      %p186 = por %p184, %p185
      %p187 = scmp.ne.s32.totalorder %s179, %s181
      %p188 = scmp.eq.s32.totalorder %s35, 1
      %p189 = por %p187, %p188
      %p190 = scmp.ne.s32.totalorder %s181, %s182
      %p191 = scmp.eq.s32.totalorder %s35, 0
      %p192 = por %p190, %p191
      %p193 = scmp.ne.s32.totalorder %s181, %s182
      %p194 = scmp.eq.s32.totalorder %s36, 1
      %p195 = por %p193, %p194
      %p197 = scmp.ne.s32.totalorder %s182, %s196
      %p198 = scmp.eq.s32.totalorder %s36, 0
      %p199 = por %p197, %p198
      %s201 = sadd.s32 %s200, 1
      %p204 = scmp.eq.s32.totalorder %s30, 1
      %p205 = scmp.ne.s32.totalorder %s200, %s202
      %p206 = scmp.eq.s32.totalorder %s30, 0
      %p207 = por %p205, %p206
      %p208 = scmp.ne.s32.totalorder %s200, %s202
      %p209 = scmp.eq.s32.totalorder %s35, 1
      %p210 = por %p208, %p209
      %p211 = scmp.ne.s32.totalorder %s202, %s203
      %p212 = scmp.eq.s32.totalorder %s35, 0
      %p213 = por %p211, %p212
      %p214 = scmp.ne.s32.totalorder %s202, %s203
      %p215 = scmp.eq.s32.totalorder %s36, 1
      %p216 = por %p214, %p215
      %p218 = scmp.ne.s32.totalorder %s203, %s217
      %p219 = scmp.eq.s32.totalorder %s36, 0
      %p220 = por %p218, %p219
      %s222 = sadd.s32 %s221, 1
      %p225 = scmp.eq.s32.totalorder %s30, 1
      %p226 = scmp.ne.s32.totalorder %s221, %s223
      %p227 = scmp.eq.s32.totalorder %s30, 0
      %p228 = por %p226, %p227
      %p229 = scmp.ne.s32.totalorder %s221, %s223
      %p230 = scmp.eq.s32.totalorder %s35, 1
      %p231 = por %p229, %p230
      %p232 = scmp.ne.s32.totalorder %s223, %s224
      %p233 = scmp.eq.s32.totalorder %s35, 0
      %p234 = por %p232, %p233
      %p235 = scmp.ne.s32.totalorder %s223, %s224
      %p236 = scmp.eq.s32.totalorder %s36, 1
      %p237 = por %p235, %p236
      %p239 = scmp.ne.s32.totalorder %s224, %s238
      %p240 = scmp.eq.s32.totalorder %s36, 0
      %p241 = por %p239, %p240
      %s243 = sadd.s32 %s242, 1
      %p246 = scmp.eq.s32.totalorder %s30, 1
      %p247 = scmp.ne.s32.totalorder %s242, %s244
      %p248 = scmp.eq.s32.totalorder %s30, 0
      %p249 = por %p247, %p248
      %p250 = scmp.ne.s32.totalorder %s242, %s244
      %p251 = scmp.eq.s32.totalorder %s35, 1
      %p252 = por %p250, %p251
      %p253 = scmp.ne.s32.totalorder %s244, %s245
      %p254 = scmp.eq.s32.totalorder %s35, 0
      %p255 = por %p253, %p254
      %p256 = scmp.ne.s32.totalorder %s244, %s245
      %p257 = scmp.eq.s32.totalorder %s36, 1
      %p258 = por %p256, %p257
      %p260 = scmp.ne.s32.totalorder %s245, %s259
      %p261 = scmp.eq.s32.totalorder %s36, 0
      %p262 = por %p260, %p261
      %s264 = sadd.s32 %s263, 1
      %p267 = scmp.eq.s32.totalorder %s30, 1
      %p268 = scmp.ne.s32.totalorder %s263, %s265
      %p269 = scmp.eq.s32.totalorder %s30, 0
      %p270 = por %p268, %p269
      %p271 = scmp.ne.s32.totalorder %s263, %s265
      %p272 = scmp.eq.s32.totalorder %s35, 1
      %p273 = por %p271, %p272
      %p274 = scmp.ne.s32.totalorder %s265, %s266
      %p275 = scmp.eq.s32.totalorder %s35, 0
      %p276 = por %p274, %p275
      %p277 = scmp.ne.s32.totalorder %s265, %s266
      %p278 = scmp.eq.s32.totalorder %s36, 1
      %p279 = por %p277, %p278
      %p281 = scmp.ne.s32.totalorder %s266, %s280
      %p282 = scmp.eq.s32.totalorder %s36, 0
      %p283 = por %p281, %p282
      %s285 = sadd.s32 %s284, 1
      %p288 = scmp.eq.s32.totalorder %s30, 1
      %p289 = scmp.ne.s32.totalorder %s284, %s286
      %p290 = scmp.eq.s32.totalorder %s30, 0
      %p291 = por %p289, %p290
      %p292 = scmp.ne.s32.totalorder %s284, %s286
      %p293 = scmp.eq.s32.totalorder %s35, 1
      %p294 = por %p292, %p293
      %p295 = scmp.ne.s32.totalorder %s286, %s287
      %p296 = scmp.eq.s32.totalorder %s35, 0
      %p297 = por %p295, %p296
      %p298 = scmp.ne.s32.totalorder %s286, %s287
      %p299 = scmp.eq.s32.totalorder %s36, 1
      %p300 = por %p298, %p299
      %p302 = scmp.ne.s32.totalorder %s287, %s301
      %p303 = scmp.eq.s32.totalorder %s36, 0
      %p304 = por %p302, %p303
      %s306 = sadd.s32 %s305, 1
      %p309 = scmp.eq.s32.totalorder %s30, 1
      %p310 = scmp.ne.s32.totalorder %s305, %s307
      %p311 = scmp.eq.s32.totalorder %s30, 0
      %p312 = por %p310, %p311
      %p313 = scmp.ne.s32.totalorder %s305, %s307
      %p314 = scmp.eq.s32.totalorder %s35, 1
      %p315 = por %p313, %p314
      %p316 = scmp.ne.s32.totalorder %s307, %s308
      %p317 = scmp.eq.s32.totalorder %s35, 0
      %p318 = por %p316, %p317
      %p319 = scmp.ne.s32.totalorder %s307, %s308
      %p320 = scmp.eq.s32.totalorder %s36, 1
      %p321 = por %p319, %p320
      %p323 = scmp.ne.s32.totalorder %s308, %s322
      %p324 = scmp.eq.s32.totalorder %s36, 0
      %p325 = por %p323, %p324
      %s327 = sadd.s32 %s326, 1
      %p330 = scmp.eq.s32.totalorder %s30, 1
      %p331 = scmp.ne.s32.totalorder %s326, %s328
      %p332 = scmp.eq.s32.totalorder %s30, 0
      %p333 = por %p331, %p332
      %p334 = scmp.ne.s32.totalorder %s326, %s328
      %p335 = scmp.eq.s32.totalorder %s35, 1
      %p336 = por %p334, %p335
      %p337 = scmp.ne.s32.totalorder %s328, %s329
      %p338 = scmp.eq.s32.totalorder %s35, 0
      %p339 = por %p337, %p338
      %p340 = scmp.ne.s32.totalorder %s328, %s329
      %p341 = scmp.eq.s32.totalorder %s36, 1
      %p342 = por %p340, %p341
      %p344 = scmp.ne.s32.totalorder %s329, %s343
      %p345 = scmp.eq.s32.totalorder %s36, 0
      %p346 = por %p344, %p345
      %s348 = sadd.s32 %s347, 1
      %p351 = scmp.eq.s32.totalorder %s30, 1
      %p352 = scmp.ne.s32.totalorder %s347, %s349
      %p353 = scmp.eq.s32.totalorder %s30, 0
      %p354 = por %p352, %p353
      %p355 = scmp.ne.s32.totalorder %s347, %s349
      %p356 = scmp.eq.s32.totalorder %s35, 1
      %p357 = por %p355, %p356
      %p358 = scmp.ne.s32.totalorder %s349, %s350
      %p359 = scmp.eq.s32.totalorder %s35, 0
      %p360 = por %p358, %p359
      %p361 = scmp.ne.s32.totalorder %s349, %s350
      %p362 = scmp.eq.s32.totalorder %s36, 1
      %p363 = por %p361, %p362
      %p365 = scmp.ne.s32.totalorder %s350, %s364
      %p366 = scmp.eq.s32.totalorder %s36, 0
      %p367 = por %p365, %p366
      %s369 = sadd.s32 %s368, 1
      %p372 = scmp.eq.s32.totalorder %s30, 1
      %p373 = scmp.ne.s32.totalorder %s368, %s370
      %p374 = scmp.eq.s32.totalorder %s30, 0
      %p375 = por %p373, %p374
      %p376 = scmp.ne.s32.totalorder %s368, %s370
      %p377 = scmp.eq.s32.totalorder %s35, 1
      %p378 = por %p376, %p377
      %p379 = scmp.ne.s32.totalorder %s370, %s371
      %p380 = scmp.eq.s32.totalorder %s35, 0
      %p381 = por %p379, %p380
      %p382 = scmp.ne.s32.totalorder %s370, %s371
      %p383 = scmp.eq.s32.totalorder %s36, 1
      %p384 = por %p382, %p383
      %p386 = scmp.ne.s32.totalorder %s371, %s385
      %p387 = scmp.eq.s32.totalorder %s36, 0
      %p388 = por %p386, %p387
      %s390 = sadd.s32 %s389, 1
      %p393 = scmp.eq.s32.totalorder %s30, 1
      %p394 = scmp.ne.s32.totalorder %s389, %s391
      %p395 = scmp.eq.s32.totalorder %s30, 0
      %p396 = por %p394, %p395
      %p397 = scmp.ne.s32.totalorder %s389, %s391
      %p398 = scmp.eq.s32.totalorder %s35, 1
      %p399 = por %p397, %p398
      %p400 = scmp.ne.s32.totalorder %s391, %s392
      %p401 = scmp.eq.s32.totalorder %s35, 0
      %p402 = por %p400, %p401
      %p403 = scmp.ne.s32.totalorder %s391, %s392
      %p404 = scmp.eq.s32.totalorder %s36, 1
      %p405 = por %p403, %p404
      %p407 = scmp.ne.s32.totalorder %s392, %s406
      %p408 = scmp.eq.s32.totalorder %s36, 0
      %p409 = por %p407, %p408
      %s411 = sadd.s32 %s410, 1
      %p414 = scmp.eq.s32.totalorder %s30, 1
      %p415 = scmp.ne.s32.totalorder %s410, %s412
      %p416 = scmp.eq.s32.totalorder %s30, 0
      %p417 = por %p415, %p416
      %p418 = scmp.ne.s32.totalorder %s410, %s412
      %p419 = scmp.eq.s32.totalorder %s35, 1
      %p420 = por %p418, %p419
      %p421 = scmp.ne.s32.totalorder %s412, %s413
      %p422 = scmp.eq.s32.totalorder %s35, 0
      %p423 = por %p421, %p422
      %p424 = scmp.ne.s32.totalorder %s412, %s413
      %p425 = scmp.eq.s32.totalorder %s36, 1
      %p426 = por %p424, %p425
      %p428 = scmp.ne.s32.totalorder %s413, %s427
      %p429 = scmp.eq.s32.totalorder %s36, 0
      %p430 = por %p428, %p429
      %s432 = sadd.s32 %s431, 1
      %p435 = scmp.eq.s32.totalorder %s30, 1
      %p436 = scmp.ne.s32.totalorder %s431, %s433
      %p437 = scmp.eq.s32.totalorder %s30, 0
      %p438 = por %p436, %p437
      %p439 = scmp.ne.s32.totalorder %s431, %s433
      %p440 = scmp.eq.s32.totalorder %s35, 1
      %p441 = por %p439, %p440
      %p442 = scmp.ne.s32.totalorder %s433, %s434
      %p443 = scmp.eq.s32.totalorder %s35, 0
      %p444 = por %p442, %p443
      %p445 = scmp.ne.s32.totalorder %s433, %s434
      %p446 = scmp.eq.s32.totalorder %s36, 1
      %p447 = por %p445, %p446
      %p449 = scmp.ne.s32.totalorder %s434, %s448
      %p450 = scmp.eq.s32.totalorder %s36, 0
      %p451 = por %p449, %p450
      %s452 = ssub.s32 %s30, %s37
      %p453 = scmp.eq.s32.totalorder %s452, 0
      %s455 = sadd.s32 %s454, 1
      %s456 = scalar_select %p453, %s454, %s455
      %p459 = pneg %p453
      %p460 = scmp.eq.s32.totalorder %s30, 1
      %p461 = por %p459, %p460
      %p462 = scmp.ne.s32.totalorder %s454, %s457
      %p463 = scmp.eq.s32.totalorder %s30, 0
      %p464 = por %p462, %p463
      %p465 = scmp.ne.s32.totalorder %s454, %s457
      %p466 = scmp.eq.s32.totalorder %s35, 1
      %p467 = por %p465, %p466
      %p468 = scmp.ne.s32.totalorder %s457, %s458
      %p469 = scmp.eq.s32.totalorder %s35, 0
      %p470 = por %p468, %p469
      %p471 = scmp.ne.s32.totalorder %s457, %s458
      %p472 = scmp.eq.s32.totalorder %s36, 1
      %p473 = por %p471, %p472
      %p475 = scmp.ne.s32.totalorder %s458, %s474
      %p476 = scmp.eq.s32.totalorder %s36, 0
      %p477 = por %p475, %p476
      %s478 = ssub.s32 %s30, %s37
      %p479 = scmp.eq.s32.totalorder %s478, 0
      %s481 = sadd.s32 %s480, 1
      %s482 = scalar_select %p479, %s480, %s481
      %p485 = pneg %p479
      %p486 = scmp.eq.s32.totalorder %s30, 1
      %p487 = por %p485, %p486
      %p488 = scmp.ne.s32.totalorder %s480, %s483
      %p489 = scmp.eq.s32.totalorder %s30, 0
      %p490 = por %p488, %p489
      %p491 = scmp.ne.s32.totalorder %s480, %s483
      %p492 = scmp.eq.s32.totalorder %s35, 1
      %p493 = por %p491, %p492
      %p494 = scmp.ne.s32.totalorder %s483, %s484
      %p495 = scmp.eq.s32.totalorder %s35, 0
      %p496 = por %p494, %p495
      %p497 = scmp.ne.s32.totalorder %s483, %s484
      %p498 = scmp.eq.s32.totalorder %s36, 1
      %p499 = por %p497, %p498
      %p501 = scmp.ne.s32.totalorder %s484, %s500
      %p502 = scmp.eq.s32.totalorder %s36, 0
      %p503 = por %p501, %p502
      %p504 = scmp.le.s32.totalorder 1, %s30
      %p505 = scmp.lt.s32.totalorder %s30, 3
      %p506 = pnand %p504, %p505
      %p507 = pneg %p506
      // Predicated region
      $region9: #{tpu_custom_call.1} parent=5 // pred_check
        _
      $region10: #{tpu_custom_call.1} parent=5 // pred_check_branch
        %509 = sbr.rel (%p506) target = $region12
      $region11: #{tpu_custom_call.1} parent=5 // pred_region
        %s510 = ssub.s32 %s30, 1
        // Predicated region
        $region13: #{tpu_custom_call.1} parent=11 // pred_check
          %p511 = pneg %p129
        $region14: #{tpu_custom_call.1} parent=11 // pred_check_branch
          %513 = sbr.rel (%p511) target = $region16
        $region15: #{tpu_custom_call.1} parent=11 // pred_region
          _
        $region16: #{tpu_custom_call.1} parent=11 // pred_fallthru
          _
        // Predicated region
        $region17: #{tpu_custom_call.1} parent=11 // pred_check
          %p514 = pneg %p150
        $region18: #{tpu_custom_call.1} parent=11 // pred_check_branch
          %516 = sbr.rel (%p514) target = $region20
        $region19: #{tpu_custom_call.1} parent=11 // pred_region
          _
        $region20: #{tpu_custom_call.1} parent=11 // pred_fallthru
          _
        // Predicated region
        $region21: #{tpu_custom_call.1} parent=11 // pred_check
          %p517 = pneg %p171
        $region22: #{tpu_custom_call.1} parent=11 // pred_check_branch
          %519 = sbr.rel (%p517) target = $region24
        $region23: #{tpu_custom_call.1} parent=11 // pred_region
          _
        $region24: #{tpu_custom_call.1} parent=11 // pred_fallthru
          _
        // Predicated region
        $region25: #{tpu_custom_call.1} parent=11 // pred_check
          %p520 = pneg %p192
        $region26: #{tpu_custom_call.1} parent=11 // pred_check_branch
          %522 = sbr.rel (%p520) target = $region28
        $region27: #{tpu_custom_call.1} parent=11 // pred_region
          _
        $region28: #{tpu_custom_call.1} parent=11 // pred_fallthru
          _
        // Predicated region
        $region29: #{tpu_custom_call.1} parent=11 // pred_check
          %p523 = pneg %p213
        $region30: #{tpu_custom_call.1} parent=11 // pred_check_branch
          %525 = sbr.rel (%p523) target = $region32
        $region31: #{tpu_custom_call.1} parent=11 // pred_region
          _
        $region32: #{tpu_custom_call.1} parent=11 // pred_fallthru
          _
        // Predicated region
        $region33: #{tpu_custom_call.1} parent=11 // pred_check
          %p526 = pneg %p234
        $region34: #{tpu_custom_call.1} parent=11 // pred_check_branch
          %528 = sbr.rel (%p526) target = $region36
        $region35: #{tpu_custom_call.1} parent=11 // pred_region
          _
        $region36: #{tpu_custom_call.1} parent=11 // pred_fallthru
          _
        // Predicated region
        $region37: #{tpu_custom_call.1} parent=11 // pred_check
          %p529 = pneg %p255
        $region38: #{tpu_custom_call.1} parent=11 // pred_check_branch
          %531 = sbr.rel (%p529) target = $region40
        $region39: #{tpu_custom_call.1} parent=11 // pred_region
          _
        $region40: #{tpu_custom_call.1} parent=11 // pred_fallthru
          _
        // Predicated region
        $region41: #{tpu_custom_call.1} parent=11 // pred_check
          %p532 = pneg %p276
        $region42: #{tpu_custom_call.1} parent=11 // pred_check_branch
          %534 = sbr.rel (%p532) target = $region44
        $region43: #{tpu_custom_call.1} parent=11 // pred_region
          _
        $region44: #{tpu_custom_call.1} parent=11 // pred_fallthru
          _
        // Predicated region
        $region45: #{tpu_custom_call.1} parent=11 // pred_check
          %p535 = pneg %p297
        $region46: #{tpu_custom_call.1} parent=11 // pred_check_branch
          %537 = sbr.rel (%p535) target = $region48
        $region47: #{tpu_custom_call.1} parent=11 // pred_region
          _
        $region48: #{tpu_custom_call.1} parent=11 // pred_fallthru
          _
        // Predicated region
        $region49: #{tpu_custom_call.1} parent=11 // pred_check
          %p538 = pneg %p318
        $region50: #{tpu_custom_call.1} parent=11 // pred_check_branch
          %540 = sbr.rel (%p538) target = $region52
        $region51: #{tpu_custom_call.1} parent=11 // pred_region
          _
        $region52: #{tpu_custom_call.1} parent=11 // pred_fallthru
          _
        // Predicated region
        $region53: #{tpu_custom_call.1} parent=11 // pred_check
          %p541 = pneg %p339
        $region54: #{tpu_custom_call.1} parent=11 // pred_check_branch
          %543 = sbr.rel (%p541) target = $region56
        $region55: #{tpu_custom_call.1} parent=11 // pred_region
          _
        $region56: #{tpu_custom_call.1} parent=11 // pred_fallthru
          _
        // Predicated region
        $region57: #{tpu_custom_call.1} parent=11 // pred_check
          %p544 = pneg %p360
        $region58: #{tpu_custom_call.1} parent=11 // pred_check_branch
          %546 = sbr.rel (%p544) target = $region60
        $region59: #{tpu_custom_call.1} parent=11 // pred_region
          _
        $region60: #{tpu_custom_call.1} parent=11 // pred_fallthru
          _
        // Predicated region
        $region61: #{tpu_custom_call.1} parent=11 // pred_check
          %p547 = pneg %p381
        $region62: #{tpu_custom_call.1} parent=11 // pred_check_branch
          %549 = sbr.rel (%p547) target = $region64
        $region63: #{tpu_custom_call.1} parent=11 // pred_region
          _
        $region64: #{tpu_custom_call.1} parent=11 // pred_fallthru
          _
        // Predicated region
        $region65: #{tpu_custom_call.1} parent=11 // pred_check
          %p550 = pneg %p402
        $region66: #{tpu_custom_call.1} parent=11 // pred_check_branch
          %552 = sbr.rel (%p550) target = $region68
        $region67: #{tpu_custom_call.1} parent=11 // pred_region
          _
        $region68: #{tpu_custom_call.1} parent=11 // pred_fallthru
          _
        // Predicated region
        $region69: #{tpu_custom_call.1} parent=11 // pred_check
          %p553 = pneg %p423
        $region70: #{tpu_custom_call.1} parent=11 // pred_check_branch
          %555 = sbr.rel (%p553) target = $region72
        $region71: #{tpu_custom_call.1} parent=11 // pred_region
          _
        $region72: #{tpu_custom_call.1} parent=11 // pred_fallthru
          _
        // Predicated region
        $region73: #{tpu_custom_call.1} parent=11 // pred_check
          %p556 = pneg %p444
        $region74: #{tpu_custom_call.1} parent=11 // pred_check_branch
          %558 = sbr.rel (%p556) target = $region76
        $region75: #{tpu_custom_call.1} parent=11 // pred_region
          _
        $region76: #{tpu_custom_call.1} parent=11 // pred_fallthru
          _
      $region12: #{tpu_custom_call.1} parent=5 // pred_fallthru
        _
      %p559 = scmp.lt.s32.totalorder %s30, 2
      // Predicated region
      $region77: #{tpu_custom_call.1} parent=5 // pred_check
        %p560 = pneg %p559
      $region78: #{tpu_custom_call.1} parent=5 // pred_check_branch
        %562 = sbr.rel (%p560) target = $region80
      $region79: #{tpu_custom_call.1} parent=5 // pred_region
        // Predicated region
        $region81: #{tpu_custom_call.1} parent=79 // pred_check
          %p563 = pneg %p50
        $region82: #{tpu_custom_call.1} parent=79 // pred_check_branch
          %565 = sbr.rel (%p563) target = $region84
        $region83: #{tpu_custom_call.1} parent=79 // pred_region
          %p566 = scmp.lt.s32.totalorder %s30, 1
          %s567 = scalar_select %p566, %s30, 1
          %s568 = smul.addr %s567, 8
          %s569 = scalar_lea.vmem %s0, %s568
        $region84: #{tpu_custom_call.1} parent=79 // pred_fallthru
          _
        // Predicated region
        $region85: #{tpu_custom_call.1} parent=79 // pred_check
          %p570 = pneg %p76
        $region86: #{tpu_custom_call.1} parent=79 // pred_check_branch
          %572 = sbr.rel (%p570) target = $region88
        $region87: #{tpu_custom_call.1} parent=79 // pred_region
          %s573 = smul.u32 8, %s30
          %p574 = scmp.lt.s32.totalorder %s573, 15
          %s575 = scalar_select %p574, %s573, 15
          %s576 = smul.addr %s575, 8
          %s577 = scalar_lea.vmem %s1, %s576
          %s578 = smul.u32 8, %s30
        $region88: #{tpu_custom_call.1} parent=79 // pred_fallthru
          _
        // Predicated region
        $region89: #{tpu_custom_call.1} parent=79 // pred_check
          %p579 = pneg %p102
        $region90: #{tpu_custom_call.1} parent=79 // pred_check_branch
          %581 = sbr.rel (%p579) target = $region92
        $region91: #{tpu_custom_call.1} parent=79 // pred_region
          %s582 = smul.u32 8, %s30
          %p583 = scmp.lt.s32.totalorder %s582, 15
          %s584 = scalar_select %p583, %s582, 15
          %s585 = smul.addr %s584, 8
          %s586 = scalar_lea.vmem %s2, %s585
          %s587 = smul.u32 8, %s30
        $region92: #{tpu_custom_call.1} parent=79 // pred_fallthru
          _
      $region80: #{tpu_custom_call.1} parent=5 // pred_fallthru
        _
      %p588 = scmp.le.s32.totalorder 1, %s30
      %p589 = scmp.lt.s32.totalorder %s30, 3
      %p590 = pnand %p588, %p589
      %p591 = pneg %p590
      // Predicated region
      $region93: #{tpu_custom_call.1} parent=5 // pred_check
        _
      $region94: #{tpu_custom_call.1} parent=5 // pred_check_branch
        %593 = sbr.rel (%p590) target = $region96
      $region95: #{tpu_custom_call.1} parent=5 // pred_region
        %s594 = ssub.s32 %s30, 1
        %p595 = scmp.lt.s32.totalorder %s35, 1
        %s596 = scalar_select %p595, %s35, 1
        %s597 = smul.addr %s596, 8
        %s598 = scalar_lea.vmem %s0, %s597
        %p599 = pneg %p56
        %p600 = pneg %p53
        %s601 = smul.u32 8, %s35
        %p602 = scmp.lt.s32.totalorder %s601, 15
        %s603 = scalar_select %p602, %s601, 15
        %s604 = smul.addr %s603, 8
        %s605 = scalar_lea.vmem %s1, %s604
        %p606 = pneg %p82
        %p607 = pneg %p79
        %s608 = smul.u32 8, %s35
        %p609 = scmp.lt.s32.totalorder %s608, 15
        %s610 = scalar_select %p609, %s608, 15
        %s611 = smul.addr %s610, 8
        %s612 = scalar_lea.vmem %s2, %s611
        %p613 = pneg %p108
        %p614 = pneg %p105
        %p615 = pneg %p129
        %p616 = pneg %p126
        %p617 = pneg %p150
        %p618 = pneg %p147
        %p619 = pneg %p171
        %p620 = pneg %p168
        %p621 = pneg %p192
        %p622 = pneg %p189
        %p623 = pneg %p213
        %p624 = pneg %p210
        %p625 = pneg %p234
        %p626 = pneg %p231
        %p627 = pneg %p255
        %p628 = pneg %p252
        %p629 = pneg %p276
        %p630 = pneg %p273
        %p631 = pneg %p297
        %p632 = pneg %p294
        %p633 = pneg %p318
        %p634 = pneg %p315
        %p635 = pneg %p339
        %p636 = pneg %p336
        %p637 = pneg %p360
        %p638 = pneg %p357
        %p639 = pneg %p381
        %p640 = pneg %p378
        %p641 = pneg %p402
        %p642 = pneg %p399
        %p643 = pneg %p423
        %p644 = pneg %p420
        %p645 = pneg %p444
        %p646 = pneg %p441
        %p647 = pneg %p470
        %p648 = pneg %p467
        %s649 = sand.u32 %s457, 1
        %s650 = scalar_lea.sflag [#allocation3], %s649
        %s651 = sand.u32 %s457, 1
        %s652 = smul.addr %s651, 8
        %s653 = scalar_lea.vmem [#allocation2], %s652
        %p654 = pneg %p496
        %p655 = pneg %p493
        %s656 = smul.u32 8, %s35
        %p657 = scmp.lt.s32.totalorder %s656, 15
        %s658 = scalar_select %p657, %s656, 15
        %s659 = smul.addr %s658, 4
        %s660 = scalar_lea.vmem %s20, %s659
        %p661 = scmp.lt.s32.totalorder %s35, 1
        %s662 = scalar_select %p661, %s35, 1
        %s663 = smul.addr %s662, 8
        %s664 = scalar_lea.vmem %s0, %s663
        %s665 = smul.u32 8, %s35
        %p666 = scmp.lt.s32.totalorder %s665, 15
        %s667 = scalar_select %p666, %s665, 15
        %s668 = smul.addr %s667, 8
        %s669 = scalar_lea.vmem %s1, %s668
        %s670 = smul.u32 8, %s35
        %s671 = smul.u32 8, %s35
        %p672 = scmp.lt.s32.totalorder %s671, 15
        %s673 = scalar_select %p672, %s671, 15
        %s674 = smul.addr %s673, 8
        %s675 = scalar_lea.vmem %s2, %s674
        %s676 = smul.u32 8, %s35
        %s677 = smul.u32 8, %s35
        %p678 = scmp.lt.s32.totalorder %s677, 15
        %s679 = scalar_select %p678, %s677, 15
        %s680 = smul.addr %s679, 4
        %s681 = scalar_lea.vmem %s20, %s680
        %s682 = smul.u32 8, %s35
        %v684 = vld [vmem:[%s664] sm:$0xff]
        %v685 = vpack.c.bf16 %v684, %v684
        %v686 = vld [vmem:[%s3] sm:$0xf]
        %v687 = vld [vmem:[%s3 + $0x4] sm:$0xf]
        %v688 = vld [vmem:[%s4] sm:$0x1]
        %v690 = vlaneseq
        %v691 = vshrl.u32 %v690, 7
        %v692 = vsub.s32 0, %v691
        %v693 = vrot.slane %v688, %v692
        %v697 = vunpack.c.l.b16 %v686
        %v698 = vunpack.c.l.b16 %v687
        %v699 = vpack.c.b16 %v698, %v697
        %vm701 = vcmask 130048
        %v703 = vsel %vm701, %v685, 0
        %705 = vmatprep.subr.bf16.mxu0 0
        %706 = vmatpush1.bf16.msra.mxu0 0
        %707 = vmatprep.subr.bf16.mxu0 0
        %708 = vmatpush1.bf16.msra.mxu0 0
        %709 = vmatprep.subr.bf16.mxu0 0
        %710 = vmatpush1.bf16.msra.mxu0 0
        %711 = vmatprep.subr.bf16.mxu0 0
        %712 = vmatpush1.bf16.msra.mxu0 0
        %713 = vmatprep.subr.bf16.mxu0 0
        %714 = vmatpush1.bf16.msra.mxu0 0
        %715 = vmatprep.subr.bf16.mxu0 0
        %716 = vmatpush1.bf16.msra.mxu0 0
        %717 = vmatprep.subr.bf16.mxu0 0
        %718 = vmatpush1.bf16.msra.mxu0 0
        %719 = vmatprep.subr.bf16.mxu0 0
        %720 = vmatpush1.bf16.msra.mxu0 %v699
        %721 = vmatprep.subr.bf16.mxu0 0
        %722 = vmatpush2.bf16.msra.mxu0 0
        %723 = vmatprep.subr.bf16.mxu0 0
        %724 = vmatpush2.bf16.msra.mxu0 0
        %725 = vmatprep.subr.bf16.mxu0 0
        %726 = vmatpush2.bf16.msra.mxu0 0
        %727 = vmatprep.subr.bf16.mxu0 0
        %728 = vmatpush2.bf16.msra.mxu0 0
        %729 = vmatprep.subr.bf16.mxu0 0
        %730 = vmatpush2.bf16.msra.mxu0 0
        %731 = vmatprep.subr.bf16.mxu0 0
        %732 = vmatpush2.bf16.msra.mxu0 0
        %733 = vmatprep.subr.bf16.mxu0 0
        %734 = vmatpush2.bf16.msra.mxu0 0
        %735 = vmatprep.subr.bf16.mxu0 0
        %736 = vmatpush2.bf16.msra.mxu0 0
        %737 = vmatprep.mubr.bf16.mxu0 0
        %738 = vmatmul.mubr.bf16.gmra.mxu0 %v703
        %v739 = vpop.f32.mrf.mxu0
        %v740 = vadd.f32 %v693, %v739
        %v741 = vpop.f32.mrf.mxu0
        %v742 = vpop.f32.mrf.mxu0
        %v743 = vpop.f32.mrf.mxu0
        %744 = vdwg.mxu0
        %v745 = vmax.f32 %v740, 0.0
        %v746 = vpack.c.bf16 %v745, %v745
        %v747 = vld [vmem:[%s5] sm:$0xf]
        %v748 = vld [vmem:[%s5 + $0x4] sm:$0xf]
        %v749 = vld [vmem:[%s5 + $0x8] sm:$0xf]
        %v750 = vld [vmem:[%s5 + $0xc] sm:$0xf]
        %v751 = vld [vmem:[%s6] sm:$0x1]
        %v753 = vlaneseq
        %v754 = vshrl.u32 %v753, 7
        %v755 = vsub.s32 0, %v754
        %v756 = vrot.slane %v751, %v755
        %v762 = vunpack.c.l.b16 %v747
        %v763 = vunpack.c.l.b16 %v748
        %v764 = vunpack.c.l.b16 %v749
        %v765 = vunpack.c.l.b16 %v750
        %v766 = vpack.c.b16 %v763, %v762
        %v767 = vpack.c.b16 %v765, %v764
        %vm770 = vcmask 261120
        %v772 = vsel %vm770, %v746, 0
        %774 = vmatprep.subr.bf16.mxu0 0
        %775 = vmatpush1.bf16.msra.mxu0 0
        %776 = vmatprep.subr.bf16.mxu0 0
        %777 = vmatpush1.bf16.msra.mxu0 0
        %778 = vmatprep.subr.bf16.mxu0 0
        %779 = vmatpush1.bf16.msra.mxu0 0
        %780 = vmatprep.subr.bf16.mxu0 0
        %781 = vmatpush1.bf16.msra.mxu0 0
        %782 = vmatprep.subr.bf16.mxu0 0
        %783 = vmatpush1.bf16.msra.mxu0 0
        %784 = vmatprep.subr.bf16.mxu0 0
        %785 = vmatpush1.bf16.msra.mxu0 0
        %786 = vmatprep.subr.bf16.mxu0 0
        %787 = vmatpush1.bf16.msra.mxu0 %v767
        %788 = vmatprep.subr.bf16.mxu0 0
        %789 = vmatpush1.bf16.msra.mxu0 %v766
        %790 = vmatprep.subr.bf16.mxu0 0
        %791 = vmatpush2.bf16.msra.mxu0 0
        %792 = vmatprep.subr.bf16.mxu0 0
        %793 = vmatpush2.bf16.msra.mxu0 0
        %794 = vmatprep.subr.bf16.mxu0 0
        %795 = vmatpush2.bf16.msra.mxu0 0
        %796 = vmatprep.subr.bf16.mxu0 0
        %797 = vmatpush2.bf16.msra.mxu0 0
        %798 = vmatprep.subr.bf16.mxu0 0
        %799 = vmatpush2.bf16.msra.mxu0 0
        %800 = vmatprep.subr.bf16.mxu0 0
        %801 = vmatpush2.bf16.msra.mxu0 0
        %802 = vmatprep.subr.bf16.mxu0 0
        %803 = vmatpush2.bf16.msra.mxu0 0
        %804 = vmatprep.subr.bf16.mxu0 0
        %805 = vmatpush2.bf16.msra.mxu0 0
        %806 = vmatprep.mubr.bf16.mxu0 0
        %807 = vmatmul.mubr.bf16.gmra.mxu0 %v772
        %v808 = vpop.f32.mrf.mxu0
        %v809 = vadd.f32 %v756, %v808
        %v810 = vpop.f32.mrf.mxu0
        %v811 = vpop.f32.mrf.mxu0
        %v812 = vpop.f32.mrf.mxu0
        %813 = vdwg.mxu0
        %v814 = vmax.f32 %v809, 0.0
        %v815 = vpack.c.bf16 %v814, %v814
        %v816 = vld [vmem:[%s9] sm:$0xf]
        %v817 = vld [vmem:[%s9 + $0x4] sm:$0xf]
        %v818 = vld [vmem:[%s9 + $0x8] sm:$0xf]
        %v819 = vld [vmem:[%s9 + $0xc] sm:$0xf]
        %v824 = vunpack.c.l.b16 %v816
        %v825 = vunpack.c.l.b16 %v817
        %v826 = vunpack.c.l.b16 %v818
        %v827 = vunpack.c.l.b16 %v819
        %v828 = vpack.c.b16 %v825, %v824
        %v829 = vpack.c.b16 %v827, %v826
        %v833 = vsel %vm770, %v815, 0
        %835 = vmatprep.subr.bf16.mxu0 0
        %836 = vmatpush1.bf16.msra.mxu0 0
        %837 = vmatprep.subr.bf16.mxu0 0
        %838 = vmatpush1.bf16.msra.mxu0 0
        %839 = vmatprep.subr.bf16.mxu0 0
        %840 = vmatpush1.bf16.msra.mxu0 0
        %841 = vmatprep.subr.bf16.mxu0 0
        %842 = vmatpush1.bf16.msra.mxu0 0
        %843 = vmatprep.subr.bf16.mxu0 0
        %844 = vmatpush1.bf16.msra.mxu0 0
        %845 = vmatprep.subr.bf16.mxu0 0
        %846 = vmatpush1.bf16.msra.mxu0 0
        %847 = vmatprep.subr.bf16.mxu0 0
        %848 = vmatpush1.bf16.msra.mxu0 %v829
        %849 = vmatprep.subr.bf16.mxu0 0
        %850 = vmatpush1.bf16.msra.mxu0 %v828
        %851 = vmatprep.subr.bf16.mxu0 0
        %852 = vmatpush2.bf16.msra.mxu0 0
        %853 = vmatprep.subr.bf16.mxu0 0
        %854 = vmatpush2.bf16.msra.mxu0 0
        %855 = vmatprep.subr.bf16.mxu0 0
        %856 = vmatpush2.bf16.msra.mxu0 0
        %857 = vmatprep.subr.bf16.mxu0 0
        %858 = vmatpush2.bf16.msra.mxu0 0
        %859 = vmatprep.subr.bf16.mxu0 0
        %860 = vmatpush2.bf16.msra.mxu0 0
        %861 = vmatprep.subr.bf16.mxu0 0
        %862 = vmatpush2.bf16.msra.mxu0 0
        %863 = vmatprep.subr.bf16.mxu0 0
        %864 = vmatpush2.bf16.msra.mxu0 0
        %865 = vmatprep.subr.bf16.mxu0 0
        %866 = vmatpush2.bf16.msra.mxu0 0
        %867 = vmatprep.mubr.bf16.mxu0 0
        %868 = vmatmul.mubr.bf16.gmra.mxu0 %v833
        %v869 = vpop.f32.mrf.mxu0
        %v870 = vadd.f32 0.0, %v869
        %v871 = vpop.f32.mrf.mxu0
        %v872 = vpop.f32.mrf.mxu0
        %v873 = vpop.f32.mrf.mxu0
        %874 = vdwg.mxu0
        %v875 = vld [vmem:[%s669] sm:$0xff]
        %v876 = vld [vmem:[%s669 + $0x8] sm:$0xff]
        %v877 = vld [vmem:[%s669 + $0x10] sm:$0xff]
        %v878 = vld [vmem:[%s669 + $0x18] sm:$0xff]
        %v879 = vld [vmem:[%s669 + $0x20] sm:$0xff]
        %v880 = vld [vmem:[%s669 + $0x28] sm:$0xff]
        %v881 = vld [vmem:[%s669 + $0x30] sm:$0xff]
        %v882 = vld [vmem:[%s669 + $0x38] sm:$0xff]
        %v883 = vpack.c.bf16 %v876, %v875
        %v884 = vpack.c.bf16 %v878, %v877
        %v885 = vpack.c.bf16 %v880, %v879
        %v886 = vpack.c.bf16 %v882, %v881
        %v887 = vld [vmem:[%s7] sm:$0xf]
        %v888 = vld [vmem:[%s7 + $0x4] sm:$0x3]
        %v889 = vld [vmem:[%s8] sm:$0x1]
        %v891 = vlaneseq
        %v892 = vshrl.u32 %v891, 7
        %v893 = vsub.s32 0, %v892
        %v894 = vrot.slane %v889, %v893
        %v898 = vunpack.c.l.b16 %v887
        %v899 = vunpack.c.l.b16 %v888
        %v900 = vpack.c.b16 %v899, %v898
        %vm901 = vcmask 97280
        %v903 = vsel %vm901, %v883, 0
        %v906 = vsel %vm901, %v884, 0
        %v909 = vsel %vm901, %v885, 0
        %v912 = vsel %vm901, %v886, 0
        %vm914 = vcmask 1045504
        %v916 = vsel %vm914, %v900, 0
        %918 = vmatprep.subr.bf16.mxu0 0
        %919 = vmatpush1.bf16.msra.mxu0 0
        %920 = vmatprep.subr.bf16.mxu0 0
        %921 = vmatpush1.bf16.msra.mxu0 0
        %922 = vmatprep.subr.bf16.mxu0 0
        %923 = vmatpush1.bf16.msra.mxu0 0
        %924 = vmatprep.subr.bf16.mxu0 0
        %925 = vmatpush1.bf16.msra.mxu0 0
        %926 = vmatprep.subr.bf16.mxu0 0
        %927 = vmatpush1.bf16.msra.mxu0 0
        %928 = vmatprep.subr.bf16.mxu0 0
        %929 = vmatpush1.bf16.msra.mxu0 0
        %930 = vmatprep.subr.bf16.mxu0 0
        %931 = vmatpush1.bf16.msra.mxu0 0
        %932 = vmatprep.subr.bf16.mxu0 0
        %933 = vmatpush1.bf16.msra.mxu0 %v916
        %934 = vmatprep.subr.bf16.mxu0 0
        %935 = vmatpush2.bf16.msra.mxu0 0
        %936 = vmatprep.subr.bf16.mxu0 0
        %937 = vmatpush2.bf16.msra.mxu0 0
        %938 = vmatprep.subr.bf16.mxu0 0
        %939 = vmatpush2.bf16.msra.mxu0 0
        %940 = vmatprep.subr.bf16.mxu0 0
        %941 = vmatpush2.bf16.msra.mxu0 0
        %942 = vmatprep.subr.bf16.mxu0 0
        %943 = vmatpush2.bf16.msra.mxu0 0
        %944 = vmatprep.subr.bf16.mxu0 0
        %945 = vmatpush2.bf16.msra.mxu0 0
        %946 = vmatprep.subr.bf16.mxu0 0
        %947 = vmatpush2.bf16.msra.mxu0 0
        %948 = vmatprep.subr.bf16.mxu0 0
        %949 = vmatpush2.bf16.msra.mxu0 0
        %950 = vmatprep.mubr.bf16.mxu0 0
        %951 = vmatmul.mubr.bf16.gmra.mxu0 %v903
        %v952 = vpop.f32.mrf.mxu0
        %v953 = vadd.f32 %v894, %v952
        %v954 = vpop.f32.mrf.mxu0
        %v955 = vpop.f32.mrf.mxu0
        %v956 = vadd.f32 %v894, %v955
        %v957 = vpop.f32.mrf.mxu0
        %958 = vmatprep.mubr.bf16.mxu0 0
        %959 = vmatmul.mubr.bf16.gmra.mxu0 %v906
        %v960 = vpop.f32.mrf.mxu0
        %v961 = vadd.f32 %v894, %v960
        %v962 = vpop.f32.mrf.mxu0
        %v963 = vpop.f32.mrf.mxu0
        %v964 = vadd.f32 %v894, %v963
        %v965 = vpop.f32.mrf.mxu0
        %966 = vmatprep.mubr.bf16.mxu0 0
        %967 = vmatmul.mubr.bf16.gmra.mxu0 %v909
        %v968 = vpop.f32.mrf.mxu0
        %v969 = vadd.f32 %v894, %v968
        %v970 = vpop.f32.mrf.mxu0
        %v971 = vpop.f32.mrf.mxu0
        %v972 = vadd.f32 %v894, %v971
        %v973 = vpop.f32.mrf.mxu0
        %974 = vmatprep.mubr.bf16.mxu0 0
        %975 = vmatmul.mubr.bf16.gmra.mxu0 %v912
        %v976 = vpop.f32.mrf.mxu0
        %v977 = vadd.f32 %v894, %v976
        %v978 = vpop.f32.mrf.mxu0
        %v979 = vpop.f32.mrf.mxu0
        %v980 = vadd.f32 %v894, %v979
        %v981 = vpop.f32.mrf.mxu0
        %982 = vdwg.mxu0
        %v983 = vadd.f32 %v953, %v870
        %v984 = vadd.f32 %v956, %v870
        %v985 = vadd.f32 %v961, %v870
        %v986 = vadd.f32 %v964, %v870
        %v987 = vadd.f32 %v969, %v870
        %v988 = vadd.f32 %v972, %v870
        %v989 = vadd.f32 %v977, %v870
        %v990 = vadd.f32 %v980, %v870
        %v991 = vmax.f32 %v983, 0.0
        %v992 = vmax.f32 %v984, 0.0
        %v993 = vmax.f32 %v985, 0.0
        %v994 = vmax.f32 %v986, 0.0
        %v995 = vmax.f32 %v987, 0.0
        %v996 = vmax.f32 %v988, 0.0
        %v997 = vmax.f32 %v989, 0.0
        %v998 = vmax.f32 %v990, 0.0
        %v999 = vpack.c.bf16 %v992, %v991
        %v1000 = vpack.c.bf16 %v994, %v993
        %v1001 = vpack.c.bf16 %v996, %v995
        %v1002 = vpack.c.bf16 %v998, %v997
        %v1003 = vld [vmem:[%s10] sm:$0xf]
        %v1004 = vld [vmem:[%s10 + $0x4] sm:$0xf]
        %v1005 = vld [vmem:[%s10 + $0x8] sm:$0xf]
        %v1006 = vld [vmem:[%s10 + $0xc] sm:$0xf]
        %v1007 = vld [vmem:[%s11] sm:$0x1]
        %v1009 = vlaneseq
        %v1010 = vshrl.u32 %v1009, 7
        %v1011 = vsub.s32 0, %v1010
        %v1012 = vrot.slane %v1007, %v1011
        %v1018 = vunpack.c.l.b16 %v1003
        %v1019 = vunpack.c.l.b16 %v1004
        %v1020 = vunpack.c.l.b16 %v1005
        %v1021 = vunpack.c.l.b16 %v1006
        %v1022 = vpack.c.b16 %v1019, %v1018
        %v1023 = vpack.c.b16 %v1021, %v1020
        %v1027 = vsel %vm770, %v999, 0
        %v1030 = vsel %vm770, %v1000, 0
        %v1033 = vsel %vm770, %v1001, 0
        %v1036 = vsel %vm770, %v1002, 0
        %1038 = vmatprep.subr.bf16.mxu0 0
        %1039 = vmatpush1.bf16.msra.mxu0 0
        %1040 = vmatprep.subr.bf16.mxu0 0
        %1041 = vmatpush1.bf16.msra.mxu0 0
        %1042 = vmatprep.subr.bf16.mxu0 0
        %1043 = vmatpush1.bf16.msra.mxu0 0
        %1044 = vmatprep.subr.bf16.mxu0 0
        %1045 = vmatpush1.bf16.msra.mxu0 0
        %1046 = vmatprep.subr.bf16.mxu0 0
        %1047 = vmatpush1.bf16.msra.mxu0 0
        %1048 = vmatprep.subr.bf16.mxu0 0
        %1049 = vmatpush1.bf16.msra.mxu0 0
        %1050 = vmatprep.subr.bf16.mxu0 0
        %1051 = vmatpush1.bf16.msra.mxu0 %v1023
        %1052 = vmatprep.subr.bf16.mxu0 0
        %1053 = vmatpush1.bf16.msra.mxu0 %v1022
        %1054 = vmatprep.subr.bf16.mxu0 0
        %1055 = vmatpush2.bf16.msra.mxu0 0
        %1056 = vmatprep.subr.bf16.mxu0 0
        %1057 = vmatpush2.bf16.msra.mxu0 0
        %1058 = vmatprep.subr.bf16.mxu0 0
        %1059 = vmatpush2.bf16.msra.mxu0 0
        %1060 = vmatprep.subr.bf16.mxu0 0
        %1061 = vmatpush2.bf16.msra.mxu0 0
        %1062 = vmatprep.subr.bf16.mxu0 0
        %1063 = vmatpush2.bf16.msra.mxu0 0
        %1064 = vmatprep.subr.bf16.mxu0 0
        %1065 = vmatpush2.bf16.msra.mxu0 0
        %1066 = vmatprep.subr.bf16.mxu0 0
        %1067 = vmatpush2.bf16.msra.mxu0 0
        %1068 = vmatprep.subr.bf16.mxu0 0
        %1069 = vmatpush2.bf16.msra.mxu0 0
        %1070 = vmatprep.mubr.bf16.mxu0 0
        %1071 = vmatmul.mubr.bf16.gmra.mxu0 %v1027
        %v1072 = vpop.f32.mrf.mxu0
        %v1073 = vadd.f32 %v1012, %v1072
        %v1074 = vpop.f32.mrf.mxu0
        %v1075 = vpop.f32.mrf.mxu0
        %v1076 = vadd.f32 %v1012, %v1075
        %v1077 = vpop.f32.mrf.mxu0
        %1078 = vmatprep.mubr.bf16.mxu0 0
        %1079 = vmatmul.mubr.bf16.gmra.mxu0 %v1030
        %v1080 = vpop.f32.mrf.mxu0
        %v1081 = vadd.f32 %v1012, %v1080
        %v1082 = vpop.f32.mrf.mxu0
        %v1083 = vpop.f32.mrf.mxu0
        %v1084 = vadd.f32 %v1012, %v1083
        %v1085 = vpop.f32.mrf.mxu0
        %1086 = vmatprep.mubr.bf16.mxu0 0
        %1087 = vmatmul.mubr.bf16.gmra.mxu0 %v1033
        %v1088 = vpop.f32.mrf.mxu0
        %v1089 = vadd.f32 %v1012, %v1088
        %v1090 = vpop.f32.mrf.mxu0
        %v1091 = vpop.f32.mrf.mxu0
        %v1092 = vadd.f32 %v1012, %v1091
        %v1093 = vpop.f32.mrf.mxu0
        %1094 = vmatprep.mubr.bf16.mxu0 0
        %1095 = vmatmul.mubr.bf16.gmra.mxu0 %v1036
        %v1096 = vpop.f32.mrf.mxu0
        %v1097 = vadd.f32 %v1012, %v1096
        %v1098 = vpop.f32.mrf.mxu0
        %v1099 = vpop.f32.mrf.mxu0
        %v1100 = vadd.f32 %v1012, %v1099
        %v1101 = vpop.f32.mrf.mxu0
        %1102 = vdwg.mxu0
        %v1103 = vmax.f32 %v1073, 0.0
        %v1104 = vmax.f32 %v1076, 0.0
        %v1105 = vmax.f32 %v1081, 0.0
        %v1106 = vmax.f32 %v1084, 0.0
        %v1107 = vmax.f32 %v1089, 0.0
        %v1108 = vmax.f32 %v1092, 0.0
        %v1109 = vmax.f32 %v1097, 0.0
        %v1110 = vmax.f32 %v1100, 0.0
        %v1111 = vld [vmem:[%s675] sm:$0xff]
        %v1112 = vld [vmem:[%s675 + $0x8] sm:$0xff]
        %v1113 = vld [vmem:[%s675 + $0x10] sm:$0xff]
        %v1114 = vld [vmem:[%s675 + $0x18] sm:$0xff]
        %v1115 = vld [vmem:[%s675 + $0x20] sm:$0xff]
        %v1116 = vld [vmem:[%s675 + $0x28] sm:$0xff]
        %v1117 = vld [vmem:[%s675 + $0x30] sm:$0xff]
        %v1118 = vld [vmem:[%s675 + $0x38] sm:$0xff]
        %1120 = vset.pattern.permute.xlu0 0
        %1121 = vperm.xlu0 %1120, %v1111
        %v1122 = vpop.permute.xlu0 %1121
        %1125 = vset.pattern.permute.xlu0 0
        %1126 = vperm.xlu0 %1125, %v1112
        %v1127 = vpop.permute.xlu0 %1126
        %1130 = vset.pattern.permute.xlu0 0
        %1131 = vperm.xlu0 %1130, %v1113
        %v1132 = vpop.permute.xlu0 %1131
        %1135 = vset.pattern.permute.xlu0 0
        %1136 = vperm.xlu0 %1135, %v1114
        %v1137 = vpop.permute.xlu0 %1136
        %1140 = vset.pattern.permute.xlu0 0
        %1141 = vperm.xlu0 %1140, %v1115
        %v1142 = vpop.permute.xlu0 %1141
        %1145 = vset.pattern.permute.xlu0 0
        %1146 = vperm.xlu0 %1145, %v1116
        %v1147 = vpop.permute.xlu0 %1146
        %1150 = vset.pattern.permute.xlu0 0
        %1151 = vperm.xlu0 %1150, %v1117
        %v1152 = vpop.permute.xlu0 %1151
        %1155 = vset.pattern.permute.xlu0 0
        %1156 = vperm.xlu0 %1155, %v1118
        %v1157 = vpop.permute.xlu0 %1156
        %v1159 = vmul.f32 %v1103, %v1122
        %v1160 = vmul.f32 %v1104, %v1127
        %v1161 = vmul.f32 %v1105, %v1132
        %v1162 = vmul.f32 %v1106, %v1137
        %v1163 = vmul.f32 %v1107, %v1142
        %v1164 = vmul.f32 %v1108, %v1147
        %v1165 = vmul.f32 %v1109, %v1152
        %v1166 = vmul.f32 %v1110, %v1157
        %vm1167 = vcmask 523264
        %v1168 = vsel %vm1167, %v1159, 0.0
        %v1169 = vrot.slane %v1168, 4
        %v1170 = vadd.f32 %v1168, %v1169
        %v1171 = vrot.slane %v1170, 2
        %v1172 = vadd.f32 %v1170, %v1171
        %v1173 = vrot.slane %v1172, 1
        %v1174 = vadd.f32 %v1172, %v1173
        %v1175 = vsel %vm1167, %v1160, 0.0
        %v1176 = vrot.slane %v1175, 4
        %v1177 = vadd.f32 %v1175, %v1176
        %v1178 = vrot.slane %v1177, 2
        %v1179 = vadd.f32 %v1177, %v1178
        %v1180 = vrot.slane %v1179, 1
        %v1181 = vadd.f32 %v1179, %v1180
        %v1182 = vsel %vm1167, %v1161, 0.0
        %v1183 = vrot.slane %v1182, 4
        %v1184 = vadd.f32 %v1182, %v1183
        %v1185 = vrot.slane %v1184, 2
        %v1186 = vadd.f32 %v1184, %v1185
        %v1187 = vrot.slane %v1186, 1
        %v1188 = vadd.f32 %v1186, %v1187
        %v1189 = vsel %vm1167, %v1162, 0.0
        %v1190 = vrot.slane %v1189, 4
        %v1191 = vadd.f32 %v1189, %v1190
        %v1192 = vrot.slane %v1191, 2
        %v1193 = vadd.f32 %v1191, %v1192
        %v1194 = vrot.slane %v1193, 1
        %v1195 = vadd.f32 %v1193, %v1194
        %v1196 = vsel %vm1167, %v1163, 0.0
        %v1197 = vrot.slane %v1196, 4
        %v1198 = vadd.f32 %v1196, %v1197
        %v1199 = vrot.slane %v1198, 2
        %v1200 = vadd.f32 %v1198, %v1199
        %v1201 = vrot.slane %v1200, 1
        %v1202 = vadd.f32 %v1200, %v1201
        %v1203 = vsel %vm1167, %v1164, 0.0
        %v1204 = vrot.slane %v1203, 4
        %v1205 = vadd.f32 %v1203, %v1204
        %v1206 = vrot.slane %v1205, 2
        %v1207 = vadd.f32 %v1205, %v1206
        %v1208 = vrot.slane %v1207, 1
        %v1209 = vadd.f32 %v1207, %v1208
        %v1210 = vsel %vm1167, %v1165, 0.0
        %v1211 = vrot.slane %v1210, 4
        %v1212 = vadd.f32 %v1210, %v1211
        %v1213 = vrot.slane %v1212, 2
        %v1214 = vadd.f32 %v1212, %v1213
        %v1215 = vrot.slane %v1214, 1
        %v1216 = vadd.f32 %v1214, %v1215
        %v1217 = vsel %vm1167, %v1166, 0.0
        %v1218 = vrot.slane %v1217, 4
        %v1219 = vadd.f32 %v1217, %v1218
        %v1220 = vrot.slane %v1219, 2
        %v1221 = vadd.f32 %v1219, %v1220
        %v1222 = vrot.slane %v1221, 1
        %v1223 = vadd.f32 %v1221, %v1222
        %v1224 = vsel %vm1167, %v1159, -inf
        %v1225 = vrot.slane %v1224, 4
        %v1226 = vmax.f32 %v1224, %v1225
        %v1227 = vrot.slane %v1226, 2
        %v1228 = vmax.f32 %v1226, %v1227
        %v1229 = vrot.slane %v1228, 1
        %v1230 = vmax.f32 %v1228, %v1229
        %v1231 = vsel %vm1167, %v1160, -inf
        %v1232 = vrot.slane %v1231, 4
        %v1233 = vmax.f32 %v1231, %v1232
        %v1234 = vrot.slane %v1233, 2
        %v1235 = vmax.f32 %v1233, %v1234
        %v1236 = vrot.slane %v1235, 1
        %v1237 = vmax.f32 %v1235, %v1236
        %v1238 = vsel %vm1167, %v1161, -inf
        %v1239 = vrot.slane %v1238, 4
        %v1240 = vmax.f32 %v1238, %v1239
        %v1241 = vrot.slane %v1240, 2
        %v1242 = vmax.f32 %v1240, %v1241
        %v1243 = vrot.slane %v1242, 1
        %v1244 = vmax.f32 %v1242, %v1243
        %v1245 = vsel %vm1167, %v1162, -inf
        %v1246 = vrot.slane %v1245, 4
        %v1247 = vmax.f32 %v1245, %v1246
        %v1248 = vrot.slane %v1247, 2
        %v1249 = vmax.f32 %v1247, %v1248
        %v1250 = vrot.slane %v1249, 1
        %v1251 = vmax.f32 %v1249, %v1250
        %v1252 = vsel %vm1167, %v1163, -inf
        %v1253 = vrot.slane %v1252, 4
        %v1254 = vmax.f32 %v1252, %v1253
        %v1255 = vrot.slane %v1254, 2
        %v1256 = vmax.f32 %v1254, %v1255
        %v1257 = vrot.slane %v1256, 1
        %v1258 = vmax.f32 %v1256, %v1257
        %v1259 = vsel %vm1167, %v1164, -inf
        %v1260 = vrot.slane %v1259, 4
        %v1261 = vmax.f32 %v1259, %v1260
        %v1262 = vrot.slane %v1261, 2
        %v1263 = vmax.f32 %v1261, %v1262
        %v1264 = vrot.slane %v1263, 1
        %v1265 = vmax.f32 %v1263, %v1264
        %v1266 = vsel %vm1167, %v1165, -inf
        %v1267 = vrot.slane %v1266, 4
        %v1268 = vmax.f32 %v1266, %v1267
        %v1269 = vrot.slane %v1268, 2
        %v1270 = vmax.f32 %v1268, %v1269
        %v1271 = vrot.slane %v1270, 1
        %v1272 = vmax.f32 %v1270, %v1271
        %v1273 = vsel %vm1167, %v1166, -inf
        %v1274 = vrot.slane %v1273, 4
        %v1275 = vmax.f32 %v1273, %v1274
        %v1276 = vrot.slane %v1275, 2
        %v1277 = vmax.f32 %v1275, %v1276
        %v1278 = vrot.slane %v1277, 1
        %v1279 = vmax.f32 %v1277, %v1278
        %v1280 = vlaneseq
        %v1281 = vand.u32 %v1280, 127
        %vm1282 = vcmp.lt.s32.totalorder %v1281, 32
        %v1283 = vmul.f32 %v1174, 0.125
        %v1284 = vmul.f32 %v1181, 0.125
        %v1285 = vmul.f32 %v1188, 0.125
        %v1286 = vmul.f32 %v1195, 0.125
        %v1287 = vmul.f32 %v1202, 0.125
        %v1288 = vmul.f32 %v1209, 0.125
        %v1289 = vmul.f32 %v1216, 0.125
        %v1290 = vmul.f32 %v1223, 0.125
        %vm1299 = vcmask 1041409
        %v1300 = vsel %vm1299, %v1284, %v1283
        %vm1301 = vcmask 1042434
        %v1302 = vsel %vm1301, %v1285, %v1300
        %vm1303 = vcmask 1043459
        %v1304 = vsel %vm1303, %v1286, %v1302
        %vm1305 = vcmask 1044484
        %v1306 = vsel %vm1305, %v1287, %v1304
        %vm1307 = vcmask 1045509
        %v1308 = vsel %vm1307, %v1288, %v1306
        %vm1309 = vcmask 1046534
        %v1310 = vsel %vm1309, %v1289, %v1308
        %vm1311 = vcmask 1047559
        %v1312 = vsel %vm1311, %v1290, %v1310
        %v1322 = vsel %vm1299, %v1237, %v1230
        %v1323 = vsel %vm1301, %v1244, %v1322
        %v1324 = vsel %vm1303, %v1251, %v1323
        %v1325 = vsel %vm1305, %v1258, %v1324
        %v1326 = vsel %vm1307, %v1265, %v1325
        %v1327 = vsel %vm1309, %v1272, %v1326
        %v1328 = vsel %vm1311, %v1279, %v1327
        %v1330 = vsel %vm1282, %v1312, %v1328
        %v1331 = vpack.c.bf16 %v1330, %v1330
        %v1332 = vld [vmem:[%s12] sm:$0xf]
        %v1333 = vld [vmem:[%s12 + $0x4] sm:$0xf]
        %v1334 = vld [vmem:[%s12 + $0x8] sm:$0xf]
        %v1335 = vld [vmem:[%s12 + $0xc] sm:$0xf]
        %v1336 = vld [vmem:[%s12 + $0x10] sm:$0xf]
        %v1337 = vld [vmem:[%s12 + $0x14] sm:$0xf]
        %v1338 = vld [vmem:[%s12 + $0x18] sm:$0xf]
        %v1339 = vld [vmem:[%s12 + $0x1c] sm:$0xf]
        %v1348 = vunpack.c.l.b16 %v1332
        %v1349 = vunpack.c.l.b16 %v1333
        %v1350 = vunpack.c.l.b16 %v1334
        %v1351 = vunpack.c.l.b16 %v1335
        %v1352 = vunpack.c.l.b16 %v1336
        %v1353 = vunpack.c.l.b16 %v1337
        %v1354 = vunpack.c.l.b16 %v1338
        %v1355 = vunpack.c.l.b16 %v1339
        %v1356 = vpack.c.b16 %v1349, %v1348
        %v1357 = vpack.c.b16 %v1351, %v1350
        %v1358 = vpack.c.b16 %v1353, %v1352
        %v1359 = vpack.c.b16 %v1355, %v1354
        %1365 = vrot.lane.b32.xlu0 %v870, 96
        %v1366 = vpop.permute.xlu0 %1365
        %v1369 = vsel %vm1167, %v1331, 0
        %1371 = vmatprep.subr.bf16.mxu0 0
        %1372 = vmatpush1.bf16.msra.mxu0 0
        %1373 = vmatprep.subr.bf16.mxu0 0
        %1374 = vmatpush1.bf16.msra.mxu0 0
        %1375 = vmatprep.subr.bf16.mxu0 0
        %1376 = vmatpush1.bf16.msra.mxu0 0
        %1377 = vmatprep.subr.bf16.mxu0 0
        %1378 = vmatpush1.bf16.msra.mxu0 0
        %1379 = vmatprep.subr.bf16.mxu0 0
        %1380 = vmatpush1.bf16.msra.mxu0 %v1359
        %1381 = vmatprep.subr.bf16.mxu0 0
        %1382 = vmatpush1.bf16.msra.mxu0 %v1358
        %1383 = vmatprep.subr.bf16.mxu0 0
        %1384 = vmatpush1.bf16.msra.mxu0 %v1357
        %1385 = vmatprep.subr.bf16.mxu0 0
        %1386 = vmatpush1.bf16.msra.mxu0 %v1356
        %1387 = vmatprep.subr.bf16.mxu0 0
        %1388 = vmatpush2.bf16.msra.mxu0 0
        %1389 = vmatprep.subr.bf16.mxu0 0
        %1390 = vmatpush2.bf16.msra.mxu0 0
        %1391 = vmatprep.subr.bf16.mxu0 0
        %1392 = vmatpush2.bf16.msra.mxu0 0
        %1393 = vmatprep.subr.bf16.mxu0 0
        %1394 = vmatpush2.bf16.msra.mxu0 0
        %1395 = vmatprep.subr.bf16.mxu0 0
        %1396 = vmatpush2.bf16.msra.mxu0 0
        %1397 = vmatprep.subr.bf16.mxu0 0
        %1398 = vmatpush2.bf16.msra.mxu0 0
        %1399 = vmatprep.subr.bf16.mxu0 0
        %1400 = vmatpush2.bf16.msra.mxu0 0
        %1401 = vmatprep.subr.bf16.mxu0 0
        %1402 = vmatpush2.bf16.msra.mxu0 0
        %1403 = vmatprep.mubr.bf16.mxu0 0
        %1404 = vmatmul.mubr.bf16.gmra.mxu0 %v1369
        %v1405 = vpop.f32.mrf.mxu0
        %v1406 = vadd.f32 %v1366, %v1405
        %v1407 = vpop.f32.mrf.mxu0
        %v1408 = vpop.f32.mrf.mxu0
        %v1409 = vpop.f32.mrf.mxu0
        %1410 = vdwg.mxu0
        %v1411 = vld [vmem:[%s13] sm:$0x1]
        %v1413 = vlaneseq
        %v1414 = vshrl.u32 %v1413, 7
        %v1415 = vsub.s32 0, %v1414
        %v1416 = vrot.slane %v1411, %v1415
        %v1418 = vadd.f32 %v1406, %v1416
        %v1419 = vmax.f32 %v1418, 0.0
        %v1420 = vpack.c.bf16 %v1104, %v1103
        %v1421 = vpack.c.bf16 %v1106, %v1105
        %v1422 = vpack.c.bf16 %v1108, %v1107
        %v1423 = vpack.c.bf16 %v1110, %v1109
        %v1424 = vld [vmem:[%s14] sm:$0xf]
        %v1425 = vld [vmem:[%s14 + $0x4] sm:$0xf]
        %v1426 = vld [vmem:[%s14 + $0x8] sm:$0xf]
        %v1427 = vld [vmem:[%s14 + $0xc] sm:$0xf]
        %v1428 = vld [vmem:[%s14 + $0x10] sm:$0xf]
        %v1429 = vld [vmem:[%s14 + $0x14] sm:$0xf]
        %v1430 = vld [vmem:[%s14 + $0x18] sm:$0xf]
        %v1431 = vld [vmem:[%s14 + $0x1c] sm:$0xf]
        %v1432 = vld [vmem:[%s15] sm:$0x1]
        %v1434 = vlaneseq
        %v1435 = vshrl.u32 %v1434, 7
        %v1436 = vsub.s32 0, %v1435
        %v1437 = vrot.slane %v1432, %v1436
        %v1447 = vunpack.c.l.b16 %v1424
        %v1448 = vunpack.c.l.b16 %v1425
        %v1449 = vunpack.c.l.b16 %v1426
        %v1450 = vunpack.c.l.b16 %v1427
        %v1451 = vunpack.c.l.b16 %v1428
        %v1452 = vunpack.c.l.b16 %v1429
        %v1453 = vunpack.c.l.b16 %v1430
        %v1454 = vunpack.c.l.b16 %v1431
        %v1455 = vpack.c.b16 %v1448, %v1447
        %v1456 = vpack.c.b16 %v1450, %v1449
        %v1457 = vpack.c.b16 %v1452, %v1451
        %v1458 = vpack.c.b16 %v1454, %v1453
        %v1464 = vsel %vm1167, %v1420, 0
        %v1467 = vsel %vm1167, %v1421, 0
        %v1470 = vsel %vm1167, %v1422, 0
        %v1473 = vsel %vm1167, %v1423, 0
        %1475 = vmatprep.subr.bf16.mxu0 0
        %1476 = vmatpush1.bf16.msra.mxu0 0
        %1477 = vmatprep.subr.bf16.mxu0 0
        %1478 = vmatpush1.bf16.msra.mxu0 0
        %1479 = vmatprep.subr.bf16.mxu0 0
        %1480 = vmatpush1.bf16.msra.mxu0 0
        %1481 = vmatprep.subr.bf16.mxu0 0
        %1482 = vmatpush1.bf16.msra.mxu0 0
        %1483 = vmatprep.subr.bf16.mxu0 0
        %1484 = vmatpush1.bf16.msra.mxu0 %v1458
        %1485 = vmatprep.subr.bf16.mxu0 0
        %1486 = vmatpush1.bf16.msra.mxu0 %v1457
        %1487 = vmatprep.subr.bf16.mxu0 0
        %1488 = vmatpush1.bf16.msra.mxu0 %v1456
        %1489 = vmatprep.subr.bf16.mxu0 0
        %1490 = vmatpush1.bf16.msra.mxu0 %v1455
        %1491 = vmatprep.subr.bf16.mxu0 0
        %1492 = vmatpush2.bf16.msra.mxu0 0
        %1493 = vmatprep.subr.bf16.mxu0 0
        %1494 = vmatpush2.bf16.msra.mxu0 0
        %1495 = vmatprep.subr.bf16.mxu0 0
        %1496 = vmatpush2.bf16.msra.mxu0 0
        %1497 = vmatprep.subr.bf16.mxu0 0
        %1498 = vmatpush2.bf16.msra.mxu0 0
        %1499 = vmatprep.subr.bf16.mxu0 0
        %1500 = vmatpush2.bf16.msra.mxu0 0
        %1501 = vmatprep.subr.bf16.mxu0 0
        %1502 = vmatpush2.bf16.msra.mxu0 0
        %1503 = vmatprep.subr.bf16.mxu0 0
        %1504 = vmatpush2.bf16.msra.mxu0 0
        %1505 = vmatprep.subr.bf16.mxu0 0
        %1506 = vmatpush2.bf16.msra.mxu0 0
        %1507 = vmatprep.mubr.bf16.mxu0 0
        %1508 = vmatmul.mubr.bf16.gmra.mxu0 %v1464
        %v1509 = vpop.f32.mrf.mxu0
        %v1510 = vadd.f32 %v1437, %v1509
        %v1511 = vpop.f32.mrf.mxu0
        %v1512 = vpop.f32.mrf.mxu0
        %v1513 = vadd.f32 %v1437, %v1512
        %v1514 = vpop.f32.mrf.mxu0
        %1515 = vmatprep.mubr.bf16.mxu0 0
        %1516 = vmatmul.mubr.bf16.gmra.mxu0 %v1467
        %v1517 = vpop.f32.mrf.mxu0
        %v1518 = vadd.f32 %v1437, %v1517
        %v1519 = vpop.f32.mrf.mxu0
        %v1520 = vpop.f32.mrf.mxu0
        %v1521 = vadd.f32 %v1437, %v1520
        %v1522 = vpop.f32.mrf.mxu0
        %1523 = vmatprep.mubr.bf16.mxu0 0
        %1524 = vmatmul.mubr.bf16.gmra.mxu0 %v1470
        %v1525 = vpop.f32.mrf.mxu0
        %v1526 = vadd.f32 %v1437, %v1525
        %v1527 = vpop.f32.mrf.mxu0
        %v1528 = vpop.f32.mrf.mxu0
        %v1529 = vadd.f32 %v1437, %v1528
        %v1530 = vpop.f32.mrf.mxu0
        %1531 = vmatprep.mubr.bf16.mxu0 0
        %1532 = vmatmul.mubr.bf16.gmra.mxu0 %v1473
        %v1533 = vpop.f32.mrf.mxu0
        %v1534 = vadd.f32 %v1437, %v1533
        %v1535 = vpop.f32.mrf.mxu0
        %v1536 = vpop.f32.mrf.mxu0
        %v1537 = vadd.f32 %v1437, %v1536
        %v1538 = vpop.f32.mrf.mxu0
        %1539 = vdwg.mxu0
        %v1540 = vpack.c.bf16 %v1419, %v1419
        %v1541 = vld [vmem:[%s16] sm:$0xf]
        %v1542 = vld [vmem:[%s16 + $0x4] sm:$0xf]
        %v1543 = vld [vmem:[%s16 + $0x8] sm:$0xf]
        %v1544 = vld [vmem:[%s16 + $0xc] sm:$0xf]
        %v1549 = vunpack.c.l.b16 %v1541
        %v1550 = vunpack.c.l.b16 %v1542
        %v1551 = vunpack.c.l.b16 %v1543
        %v1552 = vunpack.c.l.b16 %v1544
        %v1553 = vpack.c.b16 %v1550, %v1549
        %v1554 = vpack.c.b16 %v1552, %v1551
        %v1558 = vsel %vm770, %v1540, 0
        %1560 = vmatprep.subr.bf16.mxu0 0
        %1561 = vmatpush1.bf16.msra.mxu0 0
        %1562 = vmatprep.subr.bf16.mxu0 0
        %1563 = vmatpush1.bf16.msra.mxu0 0
        %1564 = vmatprep.subr.bf16.mxu0 0
        %1565 = vmatpush1.bf16.msra.mxu0 0
        %1566 = vmatprep.subr.bf16.mxu0 0
        %1567 = vmatpush1.bf16.msra.mxu0 0
        %1568 = vmatprep.subr.bf16.mxu0 0
        %1569 = vmatpush1.bf16.msra.mxu0 0
        %1570 = vmatprep.subr.bf16.mxu0 0
        %1571 = vmatpush1.bf16.msra.mxu0 0
        %1572 = vmatprep.subr.bf16.mxu0 0
        %1573 = vmatpush1.bf16.msra.mxu0 %v1554
        %1574 = vmatprep.subr.bf16.mxu0 0
        %1575 = vmatpush1.bf16.msra.mxu0 %v1553
        %1576 = vmatprep.subr.bf16.mxu0 0
        %1577 = vmatpush2.bf16.msra.mxu0 0
        %1578 = vmatprep.subr.bf16.mxu0 0
        %1579 = vmatpush2.bf16.msra.mxu0 0
        %1580 = vmatprep.subr.bf16.mxu0 0
        %1581 = vmatpush2.bf16.msra.mxu0 0
        %1582 = vmatprep.subr.bf16.mxu0 0
        %1583 = vmatpush2.bf16.msra.mxu0 0
        %1584 = vmatprep.subr.bf16.mxu0 0
        %1585 = vmatpush2.bf16.msra.mxu0 0
        %1586 = vmatprep.subr.bf16.mxu0 0
        %1587 = vmatpush2.bf16.msra.mxu0 0
        %1588 = vmatprep.subr.bf16.mxu0 0
        %1589 = vmatpush2.bf16.msra.mxu0 0
        %1590 = vmatprep.subr.bf16.mxu0 0
        %1591 = vmatpush2.bf16.msra.mxu0 0
        %1592 = vmatprep.mubr.bf16.mxu0 0
        %1593 = vmatmul.mubr.bf16.gmra.mxu0 %v1558
        %v1594 = vpop.f32.mrf.mxu0
        %v1595 = vadd.f32 0.0, %v1594
        %v1596 = vpop.f32.mrf.mxu0
        %v1597 = vpop.f32.mrf.mxu0
        %v1598 = vpop.f32.mrf.mxu0
        %1599 = vdwg.mxu0
        %v1600 = vadd.f32 %v1510, %v1595
        %v1601 = vadd.f32 %v1513, %v1595
        %v1602 = vadd.f32 %v1518, %v1595
        %v1603 = vadd.f32 %v1521, %v1595
        %v1604 = vadd.f32 %v1526, %v1595
        %v1605 = vadd.f32 %v1529, %v1595
        %v1606 = vadd.f32 %v1534, %v1595
        %v1607 = vadd.f32 %v1537, %v1595
        %v1609 = vcombine.high %v1595, %v1595
        %v1611 = vunpack.c.l.s4 1966171168
        %v1612 = vunpack.c.0.s8 %v1611
        %v1613 = vlaneseq
        %v1614 = vshrl.u32 %v1613, 7
        %v1615 = vsub.s32 %v1612, %v1614
        %v1616 = vrot.slane %v1595, %v1615
        %v1618 = vunpack.c.l.s4 1966171168
        %v1619 = vunpack.c.0.s8 %v1618
        %v1620 = vlaneseq
        %v1621 = vshrl.u32 %v1620, 7
        %v1622 = vsub.s32 %v1619, %v1621
        %v1623 = vrot.slane %v1609, %v1622
        %v1624 = vcombine.high %v1616, %v1616
        %v1625 = vcombine.high %v1623, %v1623
        %v1627 = vunpack.c.l.s4 1966171168
        %v1628 = vunpack.c.0.s8 %v1627
        %v1629 = vlaneseq
        %v1630 = vshrl.u32 %v1629, 7
        %v1631 = vsub.s32 %v1628, %v1630
        %v1632 = vrot.slane %v1616, %v1631
        %v1634 = vunpack.c.l.s4 1966171168
        %v1635 = vunpack.c.0.s8 %v1634
        %v1636 = vlaneseq
        %v1637 = vshrl.u32 %v1636, 7
        %v1638 = vsub.s32 %v1635, %v1637
        %v1639 = vrot.slane %v1623, %v1638
        %v1641 = vunpack.c.l.s4 1966171168
        %v1642 = vunpack.c.0.s8 %v1641
        %v1643 = vlaneseq
        %v1644 = vshrl.u32 %v1643, 7
        %v1645 = vsub.s32 %v1642, %v1644
        %v1646 = vrot.slane %v1624, %v1645
        %v1648 = vunpack.c.l.s4 1966171168
        %v1649 = vunpack.c.0.s8 %v1648
        %v1650 = vlaneseq
        %v1651 = vshrl.u32 %v1650, 7
        %v1652 = vsub.s32 %v1649, %v1651
        %v1653 = vrot.slane %v1625, %v1652
        %v1654 = vcombine.high %v1632, %v1632
        %v1655 = vcombine.high %v1639, %v1639
        %v1656 = vcombine.high %v1646, %v1646
        %v1657 = vcombine.high %v1653, %v1653
        %v1658 = vlaneseq
        %v1659 = vshrl.u32 %v1658, 7
        %v1660 = vsub.s32 0, %v1659
        %v1661 = vrot.slane %v1632, %v1660
        %v1662 = vlaneseq
        %v1663 = vshrl.u32 %v1662, 7
        %v1664 = vsub.s32 0, %v1663
        %v1665 = vrot.slane %v1646, %v1664
        %v1666 = vlaneseq
        %v1667 = vshrl.u32 %v1666, 7
        %v1668 = vsub.s32 0, %v1667
        %v1669 = vrot.slane %v1654, %v1668
        %v1670 = vlaneseq
        %v1671 = vshrl.u32 %v1670, 7
        %v1672 = vsub.s32 0, %v1671
        %v1673 = vrot.slane %v1656, %v1672
        %v1674 = vlaneseq
        %v1675 = vshrl.u32 %v1674, 7
        %v1676 = vsub.s32 0, %v1675
        %v1677 = vrot.slane %v1639, %v1676
        %v1678 = vlaneseq
        %v1679 = vshrl.u32 %v1678, 7
        %v1680 = vsub.s32 0, %v1679
        %v1681 = vrot.slane %v1653, %v1680
        %v1682 = vlaneseq
        %v1683 = vshrl.u32 %v1682, 7
        %v1684 = vsub.s32 0, %v1683
        %v1685 = vrot.slane %v1655, %v1684
        %v1686 = vlaneseq
        %v1687 = vshrl.u32 %v1686, 7
        %v1688 = vsub.s32 0, %v1687
        %v1689 = vrot.slane %v1657, %v1688
        %1690 = vrot.lane.b32.xlu0 %v1661, 96
        %v1691 = vpop.permute.xlu0 %1690
        %1692 = vrot.lane.b32.xlu0 %v1665, 96
        %v1693 = vpop.permute.xlu0 %1692
        %1694 = vrot.lane.b32.xlu0 %v1669, 96
        %v1695 = vpop.permute.xlu0 %1694
        %1696 = vrot.lane.b32.xlu0 %v1673, 96
        %v1697 = vpop.permute.xlu0 %1696
        %1698 = vrot.lane.b32.xlu0 %v1677, 96
        %v1699 = vpop.permute.xlu0 %1698
        %1700 = vrot.lane.b32.xlu0 %v1681, 96
        %v1701 = vpop.permute.xlu0 %1700
        %1702 = vrot.lane.b32.xlu0 %v1685, 96
        %v1703 = vpop.permute.xlu0 %1702
        %1704 = vrot.lane.b32.xlu0 %v1689, 96
        %v1705 = vpop.permute.xlu0 %1704
        %v1714 = vadd.f32 %v1600, %v1691
        %v1715 = vadd.f32 %v1601, %v1693
        %v1716 = vadd.f32 %v1602, %v1695
        %v1717 = vadd.f32 %v1603, %v1697
        %v1718 = vadd.f32 %v1604, %v1699
        %v1719 = vadd.f32 %v1605, %v1701
        %v1720 = vadd.f32 %v1606, %v1703
        %v1721 = vadd.f32 %v1607, %v1705
        %v1722 = vmax.f32 %v1714, 0.0
        %v1723 = vmax.f32 %v1715, 0.0
        %v1724 = vmax.f32 %v1716, 0.0
        %v1725 = vmax.f32 %v1717, 0.0
        %v1726 = vmax.f32 %v1718, 0.0
        %v1727 = vmax.f32 %v1719, 0.0
        %v1728 = vmax.f32 %v1720, 0.0
        %v1729 = vmax.f32 %v1721, 0.0
        %v1730 = vpack.c.bf16 %v1723, %v1722
        %v1731 = vpack.c.bf16 %v1725, %v1724
        %v1732 = vpack.c.bf16 %v1727, %v1726
        %v1733 = vpack.c.bf16 %v1729, %v1728
        %v1734 = vld [vmem:[%s17] sm:$0xf]
        %v1735 = vld [vmem:[%s17 + $0x4] sm:$0xf]
        %v1736 = vld [vmem:[%s17 + $0x8] sm:$0xf]
        %v1737 = vld [vmem:[%s17 + $0xc] sm:$0xf]
        %v1738 = vld [vmem:[%s18] sm:$0x1]
        %v1740 = vlaneseq
        %v1741 = vshrl.u32 %v1740, 7
        %v1742 = vsub.s32 0, %v1741
        %v1743 = vrot.slane %v1738, %v1742
        %v1749 = vunpack.c.l.b16 %v1734
        %v1750 = vunpack.c.l.b16 %v1735
        %v1751 = vunpack.c.l.b16 %v1736
        %v1752 = vunpack.c.l.b16 %v1737
        %v1753 = vpack.c.b16 %v1750, %v1749
        %v1754 = vpack.c.b16 %v1752, %v1751
        %v1758 = vsel %vm770, %v1730, 0
        %v1761 = vsel %vm770, %v1731, 0
        %v1764 = vsel %vm770, %v1732, 0
        %v1767 = vsel %vm770, %v1733, 0
        %1769 = vmatprep.subr.bf16.mxu0 0
        %1770 = vmatpush1.bf16.msra.mxu0 0
        %1771 = vmatprep.subr.bf16.mxu0 0
        %1772 = vmatpush1.bf16.msra.mxu0 0
        %1773 = vmatprep.subr.bf16.mxu0 0
        %1774 = vmatpush1.bf16.msra.mxu0 0
        %1775 = vmatprep.subr.bf16.mxu0 0
        %1776 = vmatpush1.bf16.msra.mxu0 0
        %1777 = vmatprep.subr.bf16.mxu0 0
        %1778 = vmatpush1.bf16.msra.mxu0 0
        %1779 = vmatprep.subr.bf16.mxu0 0
        %1780 = vmatpush1.bf16.msra.mxu0 0
        %1781 = vmatprep.subr.bf16.mxu0 0
        %1782 = vmatpush1.bf16.msra.mxu0 %v1754
        %1783 = vmatprep.subr.bf16.mxu0 0
        %1784 = vmatpush1.bf16.msra.mxu0 %v1753
        %1785 = vmatprep.subr.bf16.mxu0 0
        %1786 = vmatpush2.bf16.msra.mxu0 0
        %1787 = vmatprep.subr.bf16.mxu0 0
        %1788 = vmatpush2.bf16.msra.mxu0 0
        %1789 = vmatprep.subr.bf16.mxu0 0
        %1790 = vmatpush2.bf16.msra.mxu0 0
        %1791 = vmatprep.subr.bf16.mxu0 0
        %1792 = vmatpush2.bf16.msra.mxu0 0
        %1793 = vmatprep.subr.bf16.mxu0 0
        %1794 = vmatpush2.bf16.msra.mxu0 0
        %1795 = vmatprep.subr.bf16.mxu0 0
        %1796 = vmatpush2.bf16.msra.mxu0 0
        %1797 = vmatprep.subr.bf16.mxu0 0
        %1798 = vmatpush2.bf16.msra.mxu0 0
        %1799 = vmatprep.subr.bf16.mxu0 0
        %1800 = vmatpush2.bf16.msra.mxu0 0
        %1801 = vmatprep.mubr.bf16.mxu0 0
        %1802 = vmatmul.mubr.bf16.gmra.mxu0 %v1758
        %v1803 = vpop.f32.mrf.mxu0
        %v1804 = vadd.f32 %v1743, %v1803
        %v1805 = vpop.f32.mrf.mxu0
        %v1806 = vpop.f32.mrf.mxu0
        %v1807 = vadd.f32 %v1743, %v1806
        %v1808 = vpop.f32.mrf.mxu0
        %1809 = vmatprep.mubr.bf16.mxu0 0
        %1810 = vmatmul.mubr.bf16.gmra.mxu0 %v1761
        %v1811 = vpop.f32.mrf.mxu0
        %v1812 = vadd.f32 %v1743, %v1811
        %v1813 = vpop.f32.mrf.mxu0
        %v1814 = vpop.f32.mrf.mxu0
        %v1815 = vadd.f32 %v1743, %v1814
        %v1816 = vpop.f32.mrf.mxu0
        %1817 = vmatprep.mubr.bf16.mxu0 0
        %1818 = vmatmul.mubr.bf16.gmra.mxu0 %v1764
        %v1819 = vpop.f32.mrf.mxu0
        %v1820 = vadd.f32 %v1743, %v1819
        %v1821 = vpop.f32.mrf.mxu0
        %v1822 = vpop.f32.mrf.mxu0
        %v1823 = vadd.f32 %v1743, %v1822
        %v1824 = vpop.f32.mrf.mxu0
        %1825 = vmatprep.mubr.bf16.mxu0 0
        %1826 = vmatmul.mubr.bf16.gmra.mxu0 %v1767
        %v1827 = vpop.f32.mrf.mxu0
        %v1828 = vadd.f32 %v1743, %v1827
        %v1829 = vpop.f32.mrf.mxu0
        %v1830 = vpop.f32.mrf.mxu0
        %v1831 = vadd.f32 %v1743, %v1830
        %v1832 = vpop.f32.mrf.mxu0
        %1833 = vdwg.mxu0
        %v1834 = vmax.f32 %v1804, 0.0
        %v1835 = vmax.f32 %v1807, 0.0
        %v1836 = vmax.f32 %v1812, 0.0
        %v1837 = vmax.f32 %v1815, 0.0
        %v1838 = vmax.f32 %v1820, 0.0
        %v1839 = vmax.f32 %v1823, 0.0
        %v1840 = vmax.f32 %v1828, 0.0
        %v1841 = vmax.f32 %v1831, 0.0
        %1842 = vst.msk [vmem:[%s653] sm:$0xff] %vm770, %v1419
        %v1843 = vpack.c.bf16 %v1835, %v1834
        %v1844 = vpack.c.bf16 %v1837, %v1836
        %v1845 = vpack.c.bf16 %v1839, %v1838
        %v1846 = vpack.c.bf16 %v1841, %v1840
        %v1851 = vunpack.c.l.b16 %v1843
        %v1852 = vunpack.c.h.b16 %v1843
        %v1853 = vunpack.c.l.b16 %v1844
        %v1854 = vunpack.c.h.b16 %v1844
        %v1855 = vunpack.c.l.b16 %v1845
        %v1856 = vunpack.c.h.b16 %v1845
        %v1857 = vunpack.c.l.b16 %v1846
        %v1858 = vunpack.c.h.b16 %v1846
        %v1859 = vpack.c.b16 %v1851, %v1851
        %v1860 = vpack.c.b16 %v1852, %v1852
        %v1861 = vpack.c.b16 %v1853, %v1853
        %v1862 = vpack.c.b16 %v1854, %v1854
        %v1863 = vpack.c.b16 %v1855, %v1855
        %v1864 = vpack.c.b16 %v1856, %v1856
        %v1865 = vpack.c.b16 %v1857, %v1857
        %v1866 = vpack.c.b16 %v1858, %v1858
        %vm1875 = vcmask 519168
        %1876 = vst.msk [vmem:[%s681] sm:$0xf] %vm1875, %v1859
        %1877 = vst.msk [vmem:[%s681 + $0x4] sm:$0xf] %vm1875, %v1860
        %1878 = vst.msk [vmem:[%s681 + $0x8] sm:$0xf] %vm1875, %v1861
        %1879 = vst.msk [vmem:[%s681 + $0xc] sm:$0xf] %vm1875, %v1862
        %1880 = vst.msk [vmem:[%s681 + $0x10] sm:$0xf] %vm1875, %v1863
        %1881 = vst.msk [vmem:[%s681 + $0x14] sm:$0xf] %vm1875, %v1864
        %1882 = vst.msk [vmem:[%s681 + $0x18] sm:$0xf] %vm1875, %v1865
        %1883 = vst.msk [vmem:[%s681 + $0x1c] sm:$0xf] %vm1875, %v1866
        %s1884 = sand.u32 %s457, 1
        %s1885 = scalar_lea.sflag [#allocation3], %s1884
        %s1886 = sand.u32 %s457, 1
        %s1887 = smul.addr %s1886, 8
        %s1888 = scalar_lea.vmem [#allocation2], %s1887
        %s1889 = smul.u32 8, %s35
        %p1890 = scmp.lt.s32.totalorder %s1889, 15
        %s1891 = scalar_select %p1890, %s1889, 15
        %s1892 = smul.addr %s1891, 4
        %s1893 = scalar_lea.vmem %s20, %s1892
        // Predicated region
        $region97: #{tpu_custom_call.1} parent=95 // pred_check
          %p1894 = pneg %p467
        $region98: #{tpu_custom_call.1} parent=95 // pred_check_branch
          %1896 = sbr.rel (%p1894) target = $region100
        $region99: #{tpu_custom_call.1} parent=95 // pred_region
          %s1898 = ssub.s32 128, 128
          %1899 = vsyncadd %s1885, %s1898
          %s1900 = smul.addr %s35, 128
          %s1901 = scalar_lea.hbm %s19, %s1900
          %s1903 = sshll.u32 %s1888, 4
          %s1904 = int_to_ptr.vmem [resolvable:$true] %s1903
          %1906 = dma.vmem_to_hbm [thread:$0]  %s1904, 128, %s1901, %s1885
        $region100: #{tpu_custom_call.1} parent=95 // pred_fallthru
          _
        // Predicated region
        $region101: #{tpu_custom_call.1} parent=95 // pred_check
          %p1907 = pneg %p493
        $region102: #{tpu_custom_call.1} parent=95 // pred_check_branch
          %1909 = sbr.rel (%p1907) target = $region104
        $region103: #{tpu_custom_call.1} parent=95 // pred_region
          %s1910 = smul.u32 8, %s35
        $region104: #{tpu_custom_call.1} parent=95 // pred_fallthru
          _
      $region96: #{tpu_custom_call.1} parent=5 // pred_fallthru
        _
      %p1911 = scmp.le.s32.totalorder 2, %s30
      // Predicated region
      $region105: #{tpu_custom_call.1} parent=5 // pred_check
        %p1912 = pneg %p1911
      $region106: #{tpu_custom_call.1} parent=5 // pred_check_branch
        %1914 = sbr.rel (%p1912) target = $region108
      $region107: #{tpu_custom_call.1} parent=5 // pred_region
        %s1915 = ssub.s32 %s30, 2
        // Predicated region
        $region109: #{tpu_custom_call.1} parent=107 // pred_check
          %p1916 = pneg %p473
        $region110: #{tpu_custom_call.1} parent=107 // pred_check_branch
          %1918 = sbr.rel (%p1916) target = $region112
        $region111: #{tpu_custom_call.1} parent=107 // pred_region
          %s1919 = sand.u32 %s458, 1
          %s1920 = scalar_lea.sflag [#allocation3], %s1919
          %s1921 = sand.u32 %s458, 1
          %s1922 = smul.addr %s1921, 8
          %s1923 = scalar_lea.vmem [#allocation2], %s1922
          %1924 = dma.done %s1920, 128
        $region112: #{tpu_custom_call.1} parent=107 // pred_fallthru
          _
        // Predicated region
        $region113: #{tpu_custom_call.1} parent=107 // pred_check
          %p1925 = pneg %p499
        $region114: #{tpu_custom_call.1} parent=107 // pred_check_branch
          %1927 = sbr.rel (%p1925) target = $region116
        $region115: #{tpu_custom_call.1} parent=107 // pred_region
          %s1928 = smul.u32 8, %s36
          %p1929 = scmp.lt.s32.totalorder %s1928, 15
          %s1930 = scalar_select %p1929, %s1928, 15
          %s1931 = smul.addr %s1930, 4
          %s1932 = scalar_lea.vmem %s20, %s1931
        $region116: #{tpu_custom_call.1} parent=107 // pred_fallthru
          _
      $region108: #{tpu_custom_call.1} parent=5 // pred_fallthru
        _
    $region6: #{tpu_custom_call.1} parent=1 // loop_footer
      %s34 = sadd.s32 1, %s30
    $region7: #{tpu_custom_call.1} parent=1 // loop_footer_branch
      %29 = sbr.rel target = $region3
    $region8: #{tpu_custom_call.1} parent=1 // loop_exit
      _
    %1933 = vsyncpa [#allocation3], 1
    %s1934 = scalar_lea.sflag [#allocation3], 1
    %1935 = vsyncpa %s1934, 1

</llo_original>
